<compile_context>
chip_gen: v7x
topology: tpu7x:2x2x1
jax: 0.10.0
libtpu: 0.0.40
codegen_flags: <defaults>
</compile_context>

<pallas_src>
import jax
import jax.numpy as jnp
from jax.experimental import pallas as pl
from jax.experimental.pallas import tpu as pltpu

# ---- module hyper-parameters (synthetic, deterministic init) ----------------
H = 32                        # n_neurons
N_LEVELS = 8                  # n_levels
F_PER_LEVEL = 2               # n_features_per_level
ENC_DIM = N_LEVELS * F_PER_LEVEL   # encoder MLP input dim = 16
BASE_RES = 16                 # base_resolution
LOG2_T = 14                   # log2_hashmap_size
SHS_DIM = 16 * 3              # flattened SH coefficients

# packed deformation output layout (lane-dense, 64 lanes)
OFF_XYZ, OFF_SCL, OFF_ROT, OFF_OPA, OFF_SHS = 0, 3, 6, 10, 11
PAYLOAD = OFF_SHS + SHS_DIM            # 59
PACK = 64                              # padded lane width of the kernel output

TN_MAX = 2048                          # max rows per grid step


# ---------------------------- Pallas kernel ---------------------------------
def deform_kernel(feat_ref, we0_ref, we1_ref, w0_ref, w1_ref, w2_ref, d_ref):
    """Fused encoder MLP + 5 deformation heads for one row tile.

    5 lane-dense MXU matmuls total; bf16 operands, f32 accumulation; activations
    stored bf16 right at the ReLU to keep VMEM/vreg pressure low.
    """
    bf16 = jnp.bfloat16
    f32 = jnp.float32
    feat = feat_ref[...]                                                   # [TN,16] bf16

    # enc_model MLP: 1 hidden layer, ReLU hidden, ReLU output activation
    # (the module's `activation` config; chosen as 'ReLU' here).
    h = jnp.maximum(jnp.dot(feat, we0_ref[...],
                            preferred_element_type=f32), 0.0).astype(bf16)     # [TN,32]
    hidden = jnp.maximum(jnp.dot(h, we1_ref[...],
                                 preferred_element_type=f32), 0.0).astype(bf16)  # [TN,32]

    # 5 fused deformation heads (tcnn Network: 2 hidden, ReLU, linear out, no bias)
    a = jnp.maximum(jnp.dot(hidden, w0_ref[...],
                            preferred_element_type=f32), 0.0).astype(bf16)     # [TN,160]
    b = jnp.maximum(jnp.dot(a, w1_ref[...],
                            preferred_element_type=f32), 0.0).astype(bf16)     # [TN,160]
    d_ref[...] = jnp.dot(b, w2_ref[...], preferred_element_type=f32)           # [TN,64]


# ------------------------- JAX glue (encoding etc.) --------------------------
def hash_encode(x4, tables):
    """Multi-resolution 4D hash-grid encoding (tcnn 'HashGrid', per_level_scale=2).

    tcnn convention: scale_l = base_res * 2^l - 1, pos = x * scale_l + 0.5,
    hash = XOR(coord_d * prime_d) & (2^LOG2_T - 1).  With 4 input dims even the
    base level (17^4) exceeds 2^14 entries, so every level hashes (as tcnn would).

    # TODO(synk): the data-dependent gather from the 131072-entry stacked table
    # stays in plain JAX/XLA — a general large-table dynamic gather has no clean
    # Pallas/Mosaic lowering today (the 1 MiB table would fit VMEM; revisit when
    # in-kernel gather over large sublane extents is supported).  All levels and
    # corners are fetched with ONE combined gather to minimise HLO count.

    tables: [N_LEVELS, 2**LOG2_T, F_PER_LEVEL]
    """
    n = x4.shape[0]
    primes = jnp.array([1, 2654435761, 805459861, 3674653429], dtype=jnp.uint32)
    t_mask = jnp.uint32((1 << LOG2_T) - 1)
    scale = BASE_RES * (2.0 ** jnp.arange(N_LEVELS, dtype=jnp.float32)) - 1.0   # [L]

    pos = x4[:, None, :] * scale[None, :, None] + 0.5                           # [N,L,4]
    p0f = jnp.floor(pos)
    frac = pos - p0f
    # int32 -> uint32 wraps like C for negative coords (keeps indices valid)
    p0 = p0f.astype(jnp.int32).astype(jnp.uint32)                               # [N,L,4]

    # all 16 hypercube corners at once
    corners = jnp.array([[(c >> dd) & 1 for dd in range(4)] for c in range(16)],
                        dtype=jnp.uint32)                                        # [16,4]
    cc = p0[:, :, None, :] + corners[None, None, :, :]                           # [N,L,16,4]
    hsh = cc * primes[None, None, None, :]
    idx = (hsh[..., 0] ^ hsh[..., 1] ^ hsh[..., 2] ^ hsh[..., 3]) & t_mask       # [N,L,16]

    level_base = jnp.arange(N_LEVELS, dtype=jnp.uint32) * jnp.uint32(1 << LOG2_T)
    flat = (idx + level_base[None, :, None]).astype(jnp.int32)                   # [N,L,16]
    tables_flat = tables.reshape(N_LEVELS << LOG2_T, F_PER_LEVEL)
    vals = jnp.take(tables_flat, flat, axis=0)                                   # [N,L,16,2]

    cf = corners.astype(jnp.float32)                                             # [16,4]
    w = jnp.prod(cf[None, None, :, :] * frac[:, :, None, :]
                 + (1.0 - cf[None, None, :, :]) * (1.0 - frac[:, :, None, :]),
                 axis=-1)                                                        # [N,L,16]
    feat = jnp.sum(w[..., None] * vals, axis=2)                                  # [N,L,2]
    return feat.reshape(n, ENC_DIM)                                              # [N,16]


def init_params(key):
    keys = jax.random.split(key, 64)
    ki = iter(keys)

    def w(shape, s):
        return jax.random.normal(next(ki), shape, jnp.float32) * s

    params = {}
    params['tables'] = w((N_LEVELS, 1 << LOG2_T, F_PER_LEVEL), 1e-2)
    params['enc_w0'] = w((ENC_DIM, H), 0.3)
    params['enc_w1'] = w((H, H), 0.2)

    def head(out_dim):
        return (w((H, H), 0.2), w((H, H), 0.2), w((H, out_dim), 0.2))

    params['xyz'] = head(3)
    params['scales'] = head(3)
    params['rot'] = head(4)
    params['opacity'] = head(1)
    params['shs'] = head(SHS_DIM)
    return params


def pack_head_weights(params):
    """Fuse the 5 deformation heads into 3 wide bf16 matrices.

    layer-0: concat     -> [H, 5H]
    layer-1: block-diag -> [5H, 5H]
    layer-2: block-diag -> [5H, PACK], columns placed at the packed output offsets.
    """
    names = ('xyz', 'scales', 'rot', 'opacity', 'shs')
    dims = (3, 3, 4, 1, SHS_DIM)
    heads = [params[n] for n in names]

    w0 = jnp.concatenate([hd[0] for hd in heads], axis=1)                # [H, 5H]
    w1 = jnp.zeros((5 * H, 5 * H), jnp.float32)
    w2 = jnp.zeros((5 * H, PACK), jnp.float32)
    col = 0
    for i, (hd, d) in enumerate(zip(heads, dims)):
        w1 = w1.at[i * H:(i + 1) * H, i * H:(i + 1) * H].set(hd[1])
        w2 = w2.at[i * H:(i + 1) * H, col:col + d].set(hd[2])
        col += d
    bf16 = jnp.bfloat16
    return w0.astype(bf16), w1.astype(bf16), w2.astype(bf16)


def _num_tensorcores():
    """Best-effort TensorCores-per-jax-device (megacore chips = 2, else 1)."""
    try:
        kind = jax.devices()[0].device_kind.lower()
    except Exception:
        return 1
    return 2 if ('v7' in kind or 'v4' in kind or 'v5p' in kind) else 1


def _round_up(x, m):
    return ((x + m - 1) // m) * m


def _pick_tile(n, num_tc):
    """Row tile.

    Single-TC chips (v5e/v6e): one big tile (<= TN_MAX), no forced grid split —
    splitting the parallel axis buys nothing and just adds per-step overhead.
    Dual-TC (megacore) chips (v7x): target >= 4 grid steps so each core still
    double-buffers its input/output DMAs.
    """
    target_steps = 4 if num_tc >= 2 else 1
    tn = _round_up(max(1, -(-n // target_steps)), 128)
    return max(128, min(TN_MAX, tn))


def forward(params, xyz, scales, rotations, opacity, shs, time,
            xyz_bound_min, xyz_bound_max):
    N = xyz.shape[0]
    TN = _pick_tile(N, _num_tensorcores())
    n_steps = pl.cdiv(N, TN)
    Np = n_steps * TN

    contracted = (xyz - xyz_bound_min) / (xyz_bound_max - xyz_bound_min)
    mask = jnp.all((contracted >= 0.0) & (contracted <= 1.0), axis=1, keepdims=True)
    # clamp so out-of-range rows (blended away below) stay finite in the encoder
    x4 = jnp.concatenate([jnp.clip(contracted, 0.0, 1.0), time], axis=-1)
    feat = hash_encode(x4, params['tables']).astype(jnp.bfloat16)        # [N,16] bf16
    if Np != N:
        # only the narrow (32 B/row) feature array is padded, not a 256 B/row slab
        feat = jnp.pad(feat, ((0, Np - N), (0, 0)))

    # resident bf16 weights (fused heads), f32 accumulation inside the kernel
    we0 = params['enc_w0'].astype(jnp.bfloat16)
    we1 = params['enc_w1'].astype(jnp.bfloat16)
    w0, w1, w2 = pack_head_weights(params)
    weights = (we0, we1, w0, w1, w2)

    in_specs = [pl.BlockSpec((TN, ENC_DIM), lambda i: (i, 0))]
    # constant index_map -> weights stay resident in VMEM, never re-fetched
    in_specs += [pl.BlockSpec(wt.shape, lambda i: (0, 0)) for wt in weights]
    out_specs = pl.BlockSpec((TN, PACK), lambda i: (i, 0))

    flops_per_row = 2 * (ENC_DIM * H + H * H + H * 5 * H + 5 * H * 5 * H + 5 * H * PACK)
    w_bytes = sum(int(wt.size) * wt.dtype.itemsize for wt in weights)
    cost = pl.CostEstimate(
        flops=int(Np) * flops_per_row,
        transcendentals=0,
        bytes_accessed=int(Np) * (ENC_DIM * 2 + PACK * 4) + w_bytes,
    )

    d = pl.pallas_call(
        deform_kernel,
        grid_spec=pltpu.PrefetchScalarGridSpec(
            num_scalar_prefetch=0,
            grid=(n_steps,),
            in_specs=in_specs,
            out_specs=out_specs,
        ),
        out_shape=jax.ShapeDtypeStruct((Np, PACK), jnp.float32),
        compiler_params=pltpu.CompilerParams(
            dimension_semantics=("parallel",),
            vmem_limit_bytes=32 * 1024 * 1024,
        ),
        cost_estimate=cost,
    )(feat, *weights)

    d = d[:N]
    # masked residual blend fused into the (unavoidable) unpack into 5 arrays;
    # jnp.where guarantees exact pass-through for out-of-bounds rows.
    new_xyz = jnp.where(mask, xyz + d[:, OFF_XYZ:OFF_XYZ + 3], xyz)
    new_scl = jnp.where(mask, scales + d[:, OFF_SCL:OFF_SCL + 3], scales)
    new_rot = jnp.where(mask, rotations + d[:, OFF_ROT:OFF_ROT + 4], rotations)
    new_opa = jnp.where(mask, opacity + d[:, OFF_OPA:OFF_OPA + 1], opacity)
    d_shs = d[:, OFF_SHS:OFF_SHS + SHS_DIM].reshape(N, 16, 3)
    new_shs = jnp.where(mask[:, :, None], shs + d_shs, shs)

    # PyTorch return order: (new_xyz, new_scales, new_rot, new_opacity, new_shs)
    return new_xyz, new_scl, new_rot, new_opa, new_shs


# --------------------- pure-JAX f32 reference (for checking) -----------------
def reference_forward(params, xyz, scales, rotations, opacity, shs, time,
                      xyz_bound_min, xyz_bound_max):
    contracted = (xyz - xyz_bound_min) / (xyz_bound_max - xyz_bound_min)
    mask = jnp.all((contracted >= 0.0) & (contracted <= 1.0), axis=1, keepdims=True)
    x4 = jnp.concatenate([jnp.clip(contracted, 0.0, 1.0), time], axis=-1)
    feat = hash_encode(x4, params['tables'])
    h = jnp.maximum(feat @ params['enc_w0'], 0.0)
    hidden = jnp.maximum(h @ params['enc_w1'], 0.0)

    def head(p):
        a = jnp.maximum(hidden @ p[0], 0.0)
        b = jnp.maximum(a @ p[1], 0.0)
        return b @ p[2]

    d_xyz = head(params['xyz'])
    d_scl = head(params['scales'])
    d_rot = head(params['rot'])
    d_opa = head(params['opacity'])
    d_shs = head(params['shs']).reshape(-1, 16, 3)
    new_xyz = jnp.where(mask, xyz + d_xyz, xyz)
    new_scl = jnp.where(mask, scales + d_scl, scales)
    new_rot = jnp.where(mask, rotations + d_rot, rotations)
    new_opa = jnp.where(mask, opacity + d_opa, opacity)
    new_shs = jnp.where(mask[:, :, None], shs + d_shs, shs)
    return new_xyz, new_scl, new_rot, new_opa, new_shs


# ----------------------------------- main ------------------------------------
if __name__ == "__main__":
    key = jax.random.PRNGKey(0)
    kp, kx, ks, kr, ko, kh, kt = jax.random.split(key, 7)
    params = init_params(kp)

    N = 256
    xyz = jax.random.uniform(kx, (N, 3), jnp.float32, -1.2, 1.2)   # some rows out of bounds
    scales = jax.random.normal(ks, (N, 3), jnp.float32) * 0.1
    rotations = jax.random.normal(kr, (N, 4), jnp.float32)
    opacity = jax.random.normal(ko, (N, 1), jnp.float32)
    shs = jax.random.normal(kh, (N, 16, 3), jnp.float32) * 0.1
    time = jax.random.uniform(kt, (N, 1), jnp.float32)

    xyz_bound_min = jnp.array([-1.0, -1.0, -1.0], jnp.float32)
    xyz_bound_max = jnp.array([1.0, 1.0, 1.0], jnp.float32)

    fwd = jax.jit(forward)
    outs = fwd(params, xyz, scales, rotations, opacity, shs, time,
               xyz_bound_min, xyz_bound_max)
    outs = jax.block_until_ready(outs)

    new_xyz, new_scales, new_rot, new_opacity, new_shs = outs
    assert new_xyz.shape == (N, 3)
    assert new_scales.shape == (N, 3)
    assert new_rot.shape == (N, 4)
    assert new_opacity.shape == (N, 1)
    assert new_shs.shape == (N, 16, 3)

    # out-of-mask rows must pass the originals through exactly
    contracted = (xyz - xyz_bound_min) / (xyz_bound_max - xyz_bound_min)
    in_mask = jnp.all((contracted >= 0.0) & (contracted <= 1.0), axis=1, keepdims=True)
    assert bool(jnp.all(jnp.where(in_mask, True, new_xyz == xyz)))
    assert bool(jnp.all(jnp.where(in_mask[:, :, None], True, new_shs == shs)))

    # numerical check against the pure-JAX f32 reference (bf16 MXU drift expected)
    refs = reference_forward(params, xyz, scales, rotations, opacity, shs, time,
                             xyz_bound_min, xyz_bound_max)
    max_err = max(float(jnp.max(jnp.abs(a - b))) for a, b in zip(outs, refs))
    assert max_err < 5e-3, f"max abs error vs f32 reference too large: {max_err}"

    print("KERNEL_OK")
</pallas_src>

<mosaic_0001>
module attributes {stable_mosaic.version = 11 : i64} {
  func.func private @main(%arg0: i32) attributes {dimension_semantics = [#tpu.dimension_semantics<core_parallel>], iteration_bounds = array<i64: 2>, tpu.core_type = #tpu.core_type<sc_scalar_subcore>, window_params = []} {
    return
  }
}

module attributes {stable_mosaic.version = 11 : i64} {
  func.func private @main(%arg0: i32) attributes {dimension_semantics = [#tpu.dimension_semantics<core_parallel>], iteration_bounds = array<i64: 2>, tpu.core_type = #tpu.core_type<sc_scalar_subcore>, window_params = []} {
    return
  }
}

module attributes {stable_mosaic.version = 11 : i64} {
  func.func @deform_kernel(%arg0: i32, %arg1: memref<256x16xbf16, #tpu.memory_space<vmem>>, %arg2: memref<16x32xbf16, #tpu.memory_space<vmem>>, %arg3: memref<32x32xbf16, #tpu.memory_space<vmem>>, %arg4: memref<32x160xbf16, #tpu.memory_space<vmem>>, %arg5: memref<160x160xbf16, #tpu.memory_space<vmem>>, %arg6: memref<160x64xbf16, #tpu.memory_space<vmem>>, %arg7: memref<256x64xf32, #tpu.memory_space<vmem>>) attributes {dimension_semantics = [#tpu.dimension_semantics<parallel>], iteration_bounds = array<i64: 1>, scalar_prefetch = 0 : i64, scratch_operands = 0 : i64, tpu.core_type = #tpu.core_type<tc>, window_params = [{transform_indices = @transform_0, window_bounds = array<i64: 256, 16>}, {pipeline_mode = #tpu.pipeline_mode<synchronous>, transform_indices = @transform_1, window_bounds = array<i64: 16, 32>}, {pipeline_mode = #tpu.pipeline_mode<synchronous>, transform_indices = @transform_2, window_bounds = array<i64: 32, 32>}, {pipeline_mode = #tpu.pipeline_mode<synchronous>, transform_indices = @transform_3, window_bounds = array<i64: 32, 160>}, {pipeline_mode = #tpu.pipeline_mode<synchronous>, transform_indices = @transform_4, window_bounds = array<i64: 160, 160>}, {pipeline_mode = #tpu.pipeline_mode<synchronous>, transform_indices = @transform_5, window_bounds = array<i64: 160, 64>}, {transform_indices = @transform_6, window_bounds = array<i64: 256, 64>}]} {
    %c0 = arith.constant 0 : index
    %c0_0 = arith.constant 0 : index
    %0 = vector.load %arg1[%c0, %c0_0] : memref<256x16xbf16, #tpu.memory_space<vmem>>, vector<256x16xbf16>
    %c0_1 = arith.constant 0 : index
    %c0_2 = arith.constant 0 : index
    %1 = vector.load %arg2[%c0_1, %c0_2] : memref<16x32xbf16, #tpu.memory_space<vmem>>, vector<16x32xbf16>
    %cst = arith.constant dense<0.000000e+00> : vector<256x32xf32>
    %2 = tpu.matmul %0, %1, %cst {dimension_numbers = #tpu.dot_dimension_numbers<[1], [0], [0], [1], [0, 0, 1, 1], [], []>} : vector<256x16xbf16>, vector<16x32xbf16>, vector<256x32xf32> -> vector<256x32xf32>
    %cst_3 = arith.constant 0.000000e+00 : f32
    %3 = vector.broadcast %cst_3 : f32 to vector<256x32xf32>
    %4 = arith.maximumf %2, %3 : vector<256x32xf32>
    %5 = arith.truncf %4 : vector<256x32xf32> to vector<256x32xbf16>
    %c0_4 = arith.constant 0 : index
    %c0_5 = arith.constant 0 : index
    %6 = vector.load %arg3[%c0_4, %c0_5] : memref<32x32xbf16, #tpu.memory_space<vmem>>, vector<32x32xbf16>
    %cst_6 = arith.constant dense<0.000000e+00> : vector<256x32xf32>
    %7 = tpu.matmul %5, %6, %cst_6 {dimension_numbers = #tpu.dot_dimension_numbers<[1], [0], [0], [1], [0, 0, 1, 1], [], []>} : vector<256x32xbf16>, vector<32x32xbf16>, vector<256x32xf32> -> vector<256x32xf32>
    %cst_7 = arith.constant 0.000000e+00 : f32
    %8 = vector.broadcast %cst_7 : f32 to vector<256x32xf32>
    %9 = arith.maximumf %7, %8 : vector<256x32xf32>
    %10 = arith.truncf %9 : vector<256x32xf32> to vector<256x32xbf16>
    %c0_8 = arith.constant 0 : index
    %c0_9 = arith.constant 0 : index
    %11 = vector.load %arg4[%c0_8, %c0_9] : memref<32x160xbf16, #tpu.memory_space<vmem>>, vector<32x160xbf16>
    %cst_10 = arith.constant dense<0.000000e+00> : vector<256x160xf32>
    %12 = tpu.matmul %10, %11, %cst_10 {dimension_numbers = #tpu.dot_dimension_numbers<[1], [0], [0], [1], [0, 0, 1, 1], [], []>} : vector<256x32xbf16>, vector<32x160xbf16>, vector<256x160xf32> -> vector<256x160xf32>
    %cst_11 = arith.constant 0.000000e+00 : f32
    %13 = vector.broadcast %cst_11 : f32 to vector<256x160xf32>
    %14 = arith.maximumf %12, %13 : vector<256x160xf32>
    %15 = arith.truncf %14 : vector<256x160xf32> to vector<256x160xbf16>
    %c0_12 = arith.constant 0 : index
    %c0_13 = arith.constant 0 : index
    %16 = vector.load %arg5[%c0_12, %c0_13] : memref<160x160xbf16, #tpu.memory_space<vmem>>, vector<160x160xbf16>
    %cst_14 = arith.constant dense<0.000000e+00> : vector<256x160xf32>
    %17 = tpu.matmul %15, %16, %cst_14 {dimension_numbers = #tpu.dot_dimension_numbers<[1], [0], [0], [1], [0, 0, 1, 1], [], []>} : vector<256x160xbf16>, vector<160x160xbf16>, vector<256x160xf32> -> vector<256x160xf32>
    %cst_15 = arith.constant 0.000000e+00 : f32
    %18 = vector.broadcast %cst_15 : f32 to vector<256x160xf32>
    %19 = arith.maximumf %17, %18 : vector<256x160xf32>
    %20 = arith.truncf %19 : vector<256x160xf32> to vector<256x160xbf16>
    %c0_16 = arith.constant 0 : index
    %c0_17 = arith.constant 0 : index
    %21 = vector.load %arg6[%c0_16, %c0_17] : memref<160x64xbf16, #tpu.memory_space<vmem>>, vector<160x64xbf16>
    %cst_18 = arith.constant dense<0.000000e+00> : vector<256x64xf32>
    %22 = tpu.matmul %20, %21, %cst_18 {dimension_numbers = #tpu.dot_dimension_numbers<[1], [0], [0], [1], [0, 0, 1, 1], [], []>} : vector<256x160xbf16>, vector<160x64xbf16>, vector<256x64xf32> -> vector<256x64xf32>
    %c0_19 = arith.constant 0 : index
    %c0_20 = arith.constant 0 : index
    %23 = vector.load %arg7[%c0_19, %c0_20] : memref<256x64xf32, #tpu.memory_space<vmem>>, vector<256x64xf32>
    tpu.vector_store %arg7[%c0_19, %c0_20], %22 {strides = array<i32>} : memref<256x64xf32, #tpu.memory_space<vmem>>, vector<256x64xf32>,
    return
  }
  func.func @transform_0(%arg0: i32) -> (i32, i32) {
    %c0_i32 = arith.constant 0 : i32
    %c0_i32_0 = arith.constant 0 : i32
    return %arg0, %c0_i32 : i32, i32
  }
  func.func @transform_1(%arg0: i32) -> (i32, i32) {
    %c0_i32 = arith.constant 0 : i32
    %c0_i32_0 = arith.constant 0 : i32
    %c0_i32_1 = arith.constant 0 : i32
    return %c0_i32, %c0_i32_0 : i32, i32
  }
  func.func @transform_2(%arg0: i32) -> (i32, i32) {
    %c0_i32 = arith.constant 0 : i32
    %c0_i32_0 = arith.constant 0 : i32
    %c0_i32_1 = arith.constant 0 : i32
    return %c0_i32, %c0_i32_0 : i32, i32
  }
  func.func @transform_3(%arg0: i32) -> (i32, i32) {
    %c0_i32 = arith.constant 0 : i32
    %c0_i32_0 = arith.constant 0 : i32
    %c0_i32_1 = arith.constant 0 : i32
    return %c0_i32, %c0_i32_0 : i32, i32
  }
  func.func @transform_4(%arg0: i32) -> (i32, i32) {
    %c0_i32 = arith.constant 0 : i32
    %c0_i32_0 = arith.constant 0 : i32
    %c0_i32_1 = arith.constant 0 : i32
    return %c0_i32, %c0_i32_0 : i32, i32
  }
  func.func @transform_5(%arg0: i32) -> (i32, i32) {
    %c0_i32 = arith.constant 0 : i32
    %c0_i32_0 = arith.constant 0 : i32
    %c0_i32_1 = arith.constant 0 : i32
    return %c0_i32, %c0_i32_0 : i32, i32
  }
  func.func @transform_6(%arg0: i32) -> (i32, i32) {
    %c0_i32 = arith.constant 0 : i32
    %c0_i32_0 = arith.constant 0 : i32
    return %arg0, %c0_i32 : i32, i32
  }
}

</mosaic_0001>

<llo_original>
// kernel: sub.14
$region0: #{sub.14}
  #allocation0 [shape = 's32[1]{0}', space=sflag, size = 0x4, scoped, tag = 'scoped memory for sub.14']
  %s0 = inlined_call_operand.vmem [shape: f32[3], index: 0, kind: input, shape index: {}]
  %s1 = inlined_call_operand.vmem [shape: f32[3], index: 1, kind: input, shape index: {}]
  %s2 = inlined_call_operand.vmem [shape: f32[3], index: 2, kind: output, shape index: {}]
  %v3 = vld [vmem:[%s0] sm:$0x1]
  %v4 = vld [vmem:[%s1] sm:$0x1]
  %5 = xla_tuple %v3, %v4
  %6 = xla_tuple %5
  %v7 = vsub.f32 %v3, %v4
  %8 = xla_tuple %v7
  %9 = vst [vmem:[%s2] sm:$0x1] %v7

// kernel: forward.1
$region0: #{forward.1}
  #allocation0 [shape = 'u32[]', space=smem, size = 0x4, offset = 0x4, fixed_abs, tag = 'smem constant byte address 0x4 - core index']
  #allocation1 [shape = 'u32[144,128]{1,0:T(1,128)}', space=vmem, size = 0x12000, scoped, tag = 'internal scratch']
  %s0 = inlined_call_operand.vmem [shape: bf16[256,16], index: 0, kind: input, shape index: {}]
  %s1 = inlined_call_operand.vmem [shape: bf16[16,32], index: 1, kind: input, shape index: {}]
  %s2 = inlined_call_operand.vmem [shape: bf16[32,32], index: 2, kind: input, shape index: {}]
  %s3 = inlined_call_operand.vmem [shape: bf16[32,160], index: 3, kind: input, shape index: {}]
  %s4 = inlined_call_operand.vmem [shape: bf16[160,160], index: 4, kind: input, shape index: {}]
  %s5 = inlined_call_operand.vmem [shape: bf16[160,64], index: 5, kind: input, shape index: {}]
  %s6 = inlined_call_operand.vmem [shape: f32[256,64], index: 6, kind: output, shape index: {}]
  %s7 = sld [smem:[#allocation0]]
  $region34: #{forward.1} parent=0
    _
  %s9 = ssub.s32 1, %s7
  %s10 = scalar_select 0, %s9, %s7
  // Predicated region
  $region2: #{forward.1} parent=0 // pred_check
    _
  $region3: #{forward.1} parent=0 // pred_check_branch
    %12 = sbr.rel (0) target = $region5
  $region4: #{forward.1} parent=0 // pred_region
    _
  $region5: #{forward.1} parent=0 // pred_fallthru
    _
  // Predicated region
  $region6: #{forward.1} parent=0 // pred_check
    _
  $region7: #{forward.1} parent=0 // pred_check_branch
    %14 = sbr.rel (0) target = $region9
  $region8: #{forward.1} parent=0 // pred_region
    _
  $region9: #{forward.1} parent=0 // pred_fallthru
    _
  // Predicated region
  $region10: #{forward.1} parent=0 // pred_check
    _
  $region11: #{forward.1} parent=0 // pred_check_branch
    %16 = sbr.rel (0) target = $region13
  $region12: #{forward.1} parent=0 // pred_region
    _
  $region13: #{forward.1} parent=0 // pred_fallthru
    _
  // Predicated region
  $region14: #{forward.1} parent=0 // pred_check
    _
  $region15: #{forward.1} parent=0 // pred_check_branch
    %18 = sbr.rel (0) target = $region17
  $region16: #{forward.1} parent=0 // pred_region
    _
  $region17: #{forward.1} parent=0 // pred_fallthru
    _
  // Predicated region
  $region18: #{forward.1} parent=0 // pred_check
    _
  $region19: #{forward.1} parent=0 // pred_check_branch
    %20 = sbr.rel (0) target = $region21
  $region20: #{forward.1} parent=0 // pred_region
    _
  $region21: #{forward.1} parent=0 // pred_fallthru
    _
  // Predicated region
  $region22: #{forward.1} parent=0 // pred_check
    _
  $region23: #{forward.1} parent=0 // pred_check_branch
    %22 = sbr.rel (0) target = $region25
  $region24: #{forward.1} parent=0 // pred_region
    _
  $region25: #{forward.1} parent=0 // pred_fallthru
    _
  %v24 = vld [vmem:[%s0] sm:$0xf]
  %v25 = vld [vmem:[%s0 + $0x4] sm:$0xf]
  %v26 = vld [vmem:[%s0 + $0x8] sm:$0xf]
  %v27 = vld [vmem:[%s0 + $0xc] sm:$0xf]
  %v28 = vld [vmem:[%s0 + $0x10] sm:$0xf]
  %v29 = vld [vmem:[%s0 + $0x14] sm:$0xf]
  %v30 = vld [vmem:[%s0 + $0x18] sm:$0xf]
  %v31 = vld [vmem:[%s0 + $0x1c] sm:$0xf]
  %v32 = vld [vmem:[%s0 + $0x20] sm:$0xf]
  %v33 = vld [vmem:[%s0 + $0x24] sm:$0xf]
  %v34 = vld [vmem:[%s0 + $0x28] sm:$0xf]
  %v35 = vld [vmem:[%s0 + $0x2c] sm:$0xf]
  %v36 = vld [vmem:[%s0 + $0x30] sm:$0xf]
  %v37 = vld [vmem:[%s0 + $0x34] sm:$0xf]
  %v38 = vld [vmem:[%s0 + $0x38] sm:$0xf]
  %v39 = vld [vmem:[%s0 + $0x3c] sm:$0xf]
  %v40 = vld [vmem:[%s0 + $0x40] sm:$0xf]
  %v41 = vld [vmem:[%s0 + $0x44] sm:$0xf]
  %v42 = vld [vmem:[%s0 + $0x48] sm:$0xf]
  %v43 = vld [vmem:[%s0 + $0x4c] sm:$0xf]
  %v44 = vld [vmem:[%s0 + $0x50] sm:$0xf]
  %v45 = vld [vmem:[%s0 + $0x54] sm:$0xf]
  %v46 = vld [vmem:[%s0 + $0x58] sm:$0xf]
  %v47 = vld [vmem:[%s0 + $0x5c] sm:$0xf]
  %v48 = vld [vmem:[%s0 + $0x60] sm:$0xf]
  %v49 = vld [vmem:[%s0 + $0x64] sm:$0xf]
  %v50 = vld [vmem:[%s0 + $0x68] sm:$0xf]
  %v51 = vld [vmem:[%s0 + $0x6c] sm:$0xf]
  %v52 = vld [vmem:[%s0 + $0x70] sm:$0xf]
  %v53 = vld [vmem:[%s0 + $0x74] sm:$0xf]
  %v54 = vld [vmem:[%s0 + $0x78] sm:$0xf]
  %v55 = vld [vmem:[%s0 + $0x7c] sm:$0xf]
  %v56 = vld [vmem:[%s1] sm:$0xf]
  %v57 = vld [vmem:[%s1 + $0x4] sm:$0xf]
  %v90 = vunpack.c.l.b16 %v24
  %v91 = vunpack.c.l.b16 %v25
  %v92 = vunpack.c.l.b16 %v26
  %v93 = vunpack.c.l.b16 %v27
  %v94 = vunpack.c.l.b16 %v28
  %v95 = vunpack.c.l.b16 %v29
  %v96 = vunpack.c.l.b16 %v30
  %v97 = vunpack.c.l.b16 %v31
  %v98 = vunpack.c.l.b16 %v32
  %v99 = vunpack.c.l.b16 %v33
  %v100 = vunpack.c.l.b16 %v34
  %v101 = vunpack.c.l.b16 %v35
  %v102 = vunpack.c.l.b16 %v36
  %v103 = vunpack.c.l.b16 %v37
  %v104 = vunpack.c.l.b16 %v38
  %v105 = vunpack.c.l.b16 %v39
  %v106 = vunpack.c.l.b16 %v40
  %v107 = vunpack.c.l.b16 %v41
  %v108 = vunpack.c.l.b16 %v42
  %v109 = vunpack.c.l.b16 %v43
  %v110 = vunpack.c.l.b16 %v44
  %v111 = vunpack.c.l.b16 %v45
  %v112 = vunpack.c.l.b16 %v46
  %v113 = vunpack.c.l.b16 %v47
  %v114 = vunpack.c.l.b16 %v48
  %v115 = vunpack.c.l.b16 %v49
  %v116 = vunpack.c.l.b16 %v50
  %v117 = vunpack.c.l.b16 %v51
  %v118 = vunpack.c.l.b16 %v52
  %v119 = vunpack.c.l.b16 %v53
  %v120 = vunpack.c.l.b16 %v54
  %v121 = vunpack.c.l.b16 %v55
  %v122 = vpack.c.b16 %v91, %v90
  %v123 = vpack.c.b16 %v93, %v92
  %v124 = vpack.c.b16 %v95, %v94
  %v125 = vpack.c.b16 %v97, %v96
  %v126 = vpack.c.b16 %v99, %v98
  %v127 = vpack.c.b16 %v101, %v100
  %v128 = vpack.c.b16 %v103, %v102
  %v129 = vpack.c.b16 %v105, %v104
  %v130 = vpack.c.b16 %v107, %v106
  %v131 = vpack.c.b16 %v109, %v108
  %v132 = vpack.c.b16 %v111, %v110
  %v133 = vpack.c.b16 %v113, %v112
  %v134 = vpack.c.b16 %v115, %v114
  %v135 = vpack.c.b16 %v117, %v116
  %v136 = vpack.c.b16 %v119, %v118
  %v137 = vpack.c.b16 %v121, %v120
  %v140 = vunpack.c.l.b16 %v56
  %v141 = vunpack.c.l.b16 %v57
  %v142 = vpack.c.b16 %v141, %v140
  %vm144 = vcmask 130048
  %v146 = vsel %vm144, %v122, 0
  %v149 = vsel %vm144, %v123, 0
  %v152 = vsel %vm144, %v124, 0
  %v155 = vsel %vm144, %v125, 0
  %v158 = vsel %vm144, %v126, 0
  %v161 = vsel %vm144, %v127, 0
  %v164 = vsel %vm144, %v128, 0
  %v167 = vsel %vm144, %v129, 0
  %v170 = vsel %vm144, %v130, 0
  %v173 = vsel %vm144, %v131, 0
  %v176 = vsel %vm144, %v132, 0
  %v179 = vsel %vm144, %v133, 0
  %v182 = vsel %vm144, %v134, 0
  %v185 = vsel %vm144, %v135, 0
  %v188 = vsel %vm144, %v136, 0
  %v191 = vsel %vm144, %v137, 0
  %193 = vmatprep.subr.bf16.mxu0 0
  %194 = vmatpush1.bf16.msra.mxu0 %v142
  %195 = vmatprep.subr.bf16.mxu0 0
  %196 = vmatpush1.bf16.msra.mxu0 0
  %197 = vmatprep.subr.bf16.mxu0 0
  %198 = vmatpush1.bf16.msra.mxu0 0
  %199 = vmatprep.subr.bf16.mxu0 0
  %200 = vmatpush1.bf16.msra.mxu0 0
  %201 = vmatprep.subr.bf16.mxu0 0
  %202 = vmatpush1.bf16.msra.mxu0 0
  %203 = vmatprep.subr.bf16.mxu0 0
  %204 = vmatpush1.bf16.msra.mxu0 0
  %205 = vmatprep.subr.bf16.mxu0 0
  %206 = vmatpush1.bf16.msra.mxu0 0
  %207 = vmatprep.subr.bf16.mxu0 0
  %208 = vmatpush1.bf16.msra.mxu0 0
  %209 = vmatprep.subr.bf16.mxu0 0
  %210 = vmatpush1.bf16.msra.mxu0 0
  %211 = vmatprep.subr.bf16.mxu0 0
  %212 = vmatpush1.bf16.msra.mxu0 0
  %213 = vmatprep.subr.bf16.mxu0 0
  %214 = vmatpush1.bf16.msra.mxu0 0
  %215 = vmatprep.subr.bf16.mxu0 0
  %216 = vmatpush1.bf16.msra.mxu0 0
  %217 = vmatprep.subr.bf16.mxu0 0
  %218 = vmatpush1.bf16.msra.mxu0 0
  %219 = vmatprep.subr.bf16.mxu0 0
  %220 = vmatpush1.bf16.msra.mxu0 0
  %221 = vmatprep.subr.bf16.mxu0 0
  %222 = vmatpush1.bf16.msra.mxu0 0
  %223 = vmatprep.subr.bf16.mxu0 0
  %224 = vmatpush1.bf16.msra.mxu0 0
  %225 = vmatprep.mubr.bf16.mxu0 0
  %226 = vmatmul.mubr.bf16.gmra.mrb[0].mxu0 %v146
  %v227 = vpop.f32.mrb[0].mxu0
  %v228 = vadd.f32 0.0, %v227
  %v229 = vpop.f32.mrb[0].mxu0
  %v230 = vpop.f32.mrb[0].mxu0
  %v231 = vadd.f32 0.0, %v230
  %v232 = vpop.f32.mrb[0].mxu0
  %233 = vmatprep.mubr.bf16.mxu0 0
  %234 = vmatmul.mubr.bf16.gmra.mrb[0].mxu0 %v149
  %v235 = vpop.f32.mrb[0].mxu0
  %v236 = vadd.f32 0.0, %v235
  %v237 = vpop.f32.mrb[0].mxu0
  %v238 = vpop.f32.mrb[0].mxu0
  %v239 = vadd.f32 0.0, %v238
  %v240 = vpop.f32.mrb[0].mxu0
  %241 = vmatprep.mubr.bf16.mxu0 0
  %242 = vmatmul.mubr.bf16.gmra.mrb[0].mxu0 %v152
  %v243 = vpop.f32.mrb[0].mxu0
  %v244 = vadd.f32 0.0, %v243
  %v245 = vpop.f32.mrb[0].mxu0
  %v246 = vpop.f32.mrb[0].mxu0
  %v247 = vadd.f32 0.0, %v246
  %v248 = vpop.f32.mrb[0].mxu0
  %249 = vmatprep.mubr.bf16.mxu0 0
  %250 = vmatmul.mubr.bf16.gmra.mrb[0].mxu0 %v155
  %v251 = vpop.f32.mrb[0].mxu0
  %v252 = vadd.f32 0.0, %v251
  %v253 = vpop.f32.mrb[0].mxu0
  %v254 = vpop.f32.mrb[0].mxu0
  %v255 = vadd.f32 0.0, %v254
  %v256 = vpop.f32.mrb[0].mxu0
  %257 = vmatprep.mubr.bf16.mxu0 0
  %258 = vmatmul.mubr.bf16.gmra.mrb[0].mxu0 %v158
  %v259 = vpop.f32.mrb[0].mxu0
  %v260 = vadd.f32 0.0, %v259
  %v261 = vpop.f32.mrb[0].mxu0
  %v262 = vpop.f32.mrb[0].mxu0
  %v263 = vadd.f32 0.0, %v262
  %v264 = vpop.f32.mrb[0].mxu0
  %265 = vmatprep.mubr.bf16.mxu0 0
  %266 = vmatmul.mubr.bf16.gmra.mrb[0].mxu0 %v161
  %v267 = vpop.f32.mrb[0].mxu0
  %v268 = vadd.f32 0.0, %v267
  %v269 = vpop.f32.mrb[0].mxu0
  %v270 = vpop.f32.mrb[0].mxu0
  %v271 = vadd.f32 0.0, %v270
  %v272 = vpop.f32.mrb[0].mxu0
  %273 = vmatprep.mubr.bf16.mxu0 0
  %274 = vmatmul.mubr.bf16.gmra.mrb[0].mxu0 %v164
  %v275 = vpop.f32.mrb[0].mxu0
  %v276 = vadd.f32 0.0, %v275
  %v277 = vpop.f32.mrb[0].mxu0
  %v278 = vpop.f32.mrb[0].mxu0
  %v279 = vadd.f32 0.0, %v278
  %v280 = vpop.f32.mrb[0].mxu0
  %281 = vmatprep.mubr.bf16.mxu0 0
  %282 = vmatmul.mubr.bf16.gmra.mrb[0].mxu0 %v167
  %v283 = vpop.f32.mrb[0].mxu0
  %v284 = vadd.f32 0.0, %v283
  %v285 = vpop.f32.mrb[0].mxu0
  %v286 = vpop.f32.mrb[0].mxu0
  %v287 = vadd.f32 0.0, %v286
  %v288 = vpop.f32.mrb[0].mxu0
  %289 = vmatprep.mubr.bf16.mxu0 0
  %290 = vmatmul.mubr.bf16.gmra.mrb[0].mxu0 %v170
  %v291 = vpop.f32.mrb[0].mxu0
  %v292 = vadd.f32 0.0, %v291
  %v293 = vpop.f32.mrb[0].mxu0
  %v294 = vpop.f32.mrb[0].mxu0
  %v295 = vadd.f32 0.0, %v294
  %v296 = vpop.f32.mrb[0].mxu0
  %297 = vmatprep.mubr.bf16.mxu0 0
  %298 = vmatmul.mubr.bf16.gmra.mrb[0].mxu0 %v173
  %v299 = vpop.f32.mrb[0].mxu0
  %v300 = vadd.f32 0.0, %v299
  %v301 = vpop.f32.mrb[0].mxu0
  %v302 = vpop.f32.mrb[0].mxu0
  %v303 = vadd.f32 0.0, %v302
  %v304 = vpop.f32.mrb[0].mxu0
  %305 = vmatprep.mubr.bf16.mxu0 0
  %306 = vmatmul.mubr.bf16.gmra.mrb[0].mxu0 %v176
  %v307 = vpop.f32.mrb[0].mxu0
  %v308 = vadd.f32 0.0, %v307
  %v309 = vpop.f32.mrb[0].mxu0
  %v310 = vpop.f32.mrb[0].mxu0
  %v311 = vadd.f32 0.0, %v310
  %v312 = vpop.f32.mrb[0].mxu0
  %313 = vmatprep.mubr.bf16.mxu0 0
  %314 = vmatmul.mubr.bf16.gmra.mrb[0].mxu0 %v179
  %v315 = vpop.f32.mrb[0].mxu0
  %v316 = vadd.f32 0.0, %v315
  %v317 = vpop.f32.mrb[0].mxu0
  %v318 = vpop.f32.mrb[0].mxu0
  %v319 = vadd.f32 0.0, %v318
  %v320 = vpop.f32.mrb[0].mxu0
  %321 = vmatprep.mubr.bf16.mxu0 0
  %322 = vmatmul.mubr.bf16.gmra.mrb[0].mxu0 %v182
  %v323 = vpop.f32.mrb[0].mxu0
  %v324 = vadd.f32 0.0, %v323
  %v325 = vpop.f32.mrb[0].mxu0
  %v326 = vpop.f32.mrb[0].mxu0
  %v327 = vadd.f32 0.0, %v326
  %v328 = vpop.f32.mrb[0].mxu0
  %329 = vmatprep.mubr.bf16.mxu0 0
  %330 = vmatmul.mubr.bf16.gmra.mrb[0].mxu0 %v185
  %v331 = vpop.f32.mrb[0].mxu0
  %v332 = vadd.f32 0.0, %v331
  %v333 = vpop.f32.mrb[0].mxu0
  %v334 = vpop.f32.mrb[0].mxu0
  %v335 = vadd.f32 0.0, %v334
  %v336 = vpop.f32.mrb[0].mxu0
  %337 = vmatprep.mubr.bf16.mxu0 0
  %338 = vmatmul.mubr.bf16.gmra.mrb[0].mxu0 %v188
  %v339 = vpop.f32.mrb[0].mxu0
  %v340 = vadd.f32 0.0, %v339
  %v341 = vpop.f32.mrb[0].mxu0
  %v342 = vpop.f32.mrb[0].mxu0
  %v343 = vadd.f32 0.0, %v342
  %v344 = vpop.f32.mrb[0].mxu0
  %345 = vmatprep.mubr.bf16.mxu0 0
  %346 = vmatmul.mubr.bf16.gmra.mrb[0].mxu0 %v191
  %v347 = vpop.f32.mrb[0].mxu0
  %v348 = vadd.f32 0.0, %v347
  %v349 = vpop.f32.mrb[0].mxu0
  %v350 = vpop.f32.mrb[0].mxu0
  %v351 = vadd.f32 0.0, %v350
  %v352 = vpop.f32.mrb[0].mxu0
  %353 = vdwg.mxu0
  %v354 = vmax.f32 %v228, 0.0
  %v355 = vmax.f32 %v231, 0.0
  %v356 = vmax.f32 %v236, 0.0
  %v357 = vmax.f32 %v239, 0.0
  %v358 = vmax.f32 %v244, 0.0
  %v359 = vmax.f32 %v247, 0.0
  %v360 = vmax.f32 %v252, 0.0
  %v361 = vmax.f32 %v255, 0.0
  %v362 = vmax.f32 %v260, 0.0
  %v363 = vmax.f32 %v263, 0.0
  %v364 = vmax.f32 %v268, 0.0
  %v365 = vmax.f32 %v271, 0.0
  %v366 = vmax.f32 %v276, 0.0
  %v367 = vmax.f32 %v279, 0.0
  %v368 = vmax.f32 %v284, 0.0
  %v369 = vmax.f32 %v287, 0.0
  %v370 = vmax.f32 %v292, 0.0
  %v371 = vmax.f32 %v295, 0.0
  %v372 = vmax.f32 %v300, 0.0
  %v373 = vmax.f32 %v303, 0.0
  %v374 = vmax.f32 %v308, 0.0
  %v375 = vmax.f32 %v311, 0.0
  %v376 = vmax.f32 %v316, 0.0
  %v377 = vmax.f32 %v319, 0.0
  %v378 = vmax.f32 %v324, 0.0
  %v379 = vmax.f32 %v327, 0.0
  %v380 = vmax.f32 %v332, 0.0
  %v381 = vmax.f32 %v335, 0.0
  %v382 = vmax.f32 %v340, 0.0
  %v383 = vmax.f32 %v343, 0.0
  %v384 = vmax.f32 %v348, 0.0
  %v385 = vmax.f32 %v351, 0.0
  %v386 = vpack.c.bf16 %v355, %v354
  %v387 = vpack.c.bf16 %v357, %v356
  %v388 = vpack.c.bf16 %v359, %v358
  %v389 = vpack.c.bf16 %v361, %v360
  %v390 = vpack.c.bf16 %v363, %v362
  %v391 = vpack.c.bf16 %v365, %v364
  %v392 = vpack.c.bf16 %v367, %v366
  %v393 = vpack.c.bf16 %v369, %v368
  %v394 = vpack.c.bf16 %v371, %v370
  %v395 = vpack.c.bf16 %v373, %v372
  %v396 = vpack.c.bf16 %v375, %v374
  %v397 = vpack.c.bf16 %v377, %v376
  %v398 = vpack.c.bf16 %v379, %v378
  %v399 = vpack.c.bf16 %v381, %v380
  %v400 = vpack.c.bf16 %v383, %v382
  %v401 = vpack.c.bf16 %v385, %v384
  %v402 = vld [vmem:[%s2] sm:$0xf]
  %v403 = vld [vmem:[%s2 + $0x4] sm:$0xf]
  %v404 = vld [vmem:[%s2 + $0x8] sm:$0xf]
  %v405 = vld [vmem:[%s2 + $0xc] sm:$0xf]
  %v410 = vunpack.c.l.b16 %v402
  %v411 = vunpack.c.l.b16 %v403
  %v412 = vunpack.c.l.b16 %v404
  %v413 = vunpack.c.l.b16 %v405
  %v414 = vpack.c.b16 %v411, %v410
  %v415 = vpack.c.b16 %v413, %v412
  %vm418 = vcmask 261120
  %v420 = vsel %vm418, %v386, 0
  %v423 = vsel %vm418, %v387, 0
  %v426 = vsel %vm418, %v388, 0
  %v429 = vsel %vm418, %v389, 0
  %v432 = vsel %vm418, %v390, 0
  %v435 = vsel %vm418, %v391, 0
  %v438 = vsel %vm418, %v392, 0
  %v441 = vsel %vm418, %v393, 0
  %v444 = vsel %vm418, %v394, 0
  %v447 = vsel %vm418, %v395, 0
  %v450 = vsel %vm418, %v396, 0
  %v453 = vsel %vm418, %v397, 0
  %v456 = vsel %vm418, %v398, 0
  %v459 = vsel %vm418, %v399, 0
  %v462 = vsel %vm418, %v400, 0
  %v465 = vsel %vm418, %v401, 0
  %467 = vmatprep.subr.bf16.mxu0 0
  %468 = vmatpush1.bf16.msra.mxu0 %v414
  %469 = vmatprep.subr.bf16.mxu0 0
  %470 = vmatpush1.bf16.msra.mxu0 %v415
  %471 = vmatprep.subr.bf16.mxu0 0
  %472 = vmatpush1.bf16.msra.mxu0 0
  %473 = vmatprep.subr.bf16.mxu0 0
  %474 = vmatpush1.bf16.msra.mxu0 0
  %475 = vmatprep.subr.bf16.mxu0 0
  %476 = vmatpush1.bf16.msra.mxu0 0
  %477 = vmatprep.subr.bf16.mxu0 0
  %478 = vmatpush1.bf16.msra.mxu0 0
  %479 = vmatprep.subr.bf16.mxu0 0
  %480 = vmatpush1.bf16.msra.mxu0 0
  %481 = vmatprep.subr.bf16.mxu0 0
  %482 = vmatpush1.bf16.msra.mxu0 0
  %483 = vmatprep.subr.bf16.mxu0 0
  %484 = vmatpush1.bf16.msra.mxu0 0
  %485 = vmatprep.subr.bf16.mxu0 0
  %486 = vmatpush1.bf16.msra.mxu0 0
  %487 = vmatprep.subr.bf16.mxu0 0
  %488 = vmatpush1.bf16.msra.mxu0 0
  %489 = vmatprep.subr.bf16.mxu0 0
  %490 = vmatpush1.bf16.msra.mxu0 0
  %491 = vmatprep.subr.bf16.mxu0 0
  %492 = vmatpush1.bf16.msra.mxu0 0
  %493 = vmatprep.subr.bf16.mxu0 0
  %494 = vmatpush1.bf16.msra.mxu0 0
  %495 = vmatprep.subr.bf16.mxu0 0
  %496 = vmatpush1.bf16.msra.mxu0 0
  %497 = vmatprep.subr.bf16.mxu0 0
  %498 = vmatpush1.bf16.msra.mxu0 0
  %499 = vmatprep.mubr.bf16.mxu0 0
  %500 = vmatmul.mubr.bf16.gmra.mrb[0].mxu0 %v420
  %v501 = vpop.f32.mrb[0].mxu0
  %v502 = vadd.f32 0.0, %v501
  %v503 = vpop.f32.mrb[0].mxu0
  %v504 = vpop.f32.mrb[0].mxu0
  %v505 = vadd.f32 0.0, %v504
  %v506 = vpop.f32.mrb[0].mxu0
  %507 = vmatprep.mubr.bf16.mxu0 0
  %508 = vmatmul.mubr.bf16.gmra.mrb[0].mxu0 %v423
  %v509 = vpop.f32.mrb[0].mxu0
  %v510 = vadd.f32 0.0, %v509
  %v511 = vpop.f32.mrb[0].mxu0
  %v512 = vpop.f32.mrb[0].mxu0
  %v513 = vadd.f32 0.0, %v512
  %v514 = vpop.f32.mrb[0].mxu0
  %515 = vmatprep.mubr.bf16.mxu0 0
  %516 = vmatmul.mubr.bf16.gmra.mrb[0].mxu0 %v426
  %v517 = vpop.f32.mrb[0].mxu0
  %v518 = vadd.f32 0.0, %v517
  %v519 = vpop.f32.mrb[0].mxu0
  %v520 = vpop.f32.mrb[0].mxu0
  %v521 = vadd.f32 0.0, %v520
  %v522 = vpop.f32.mrb[0].mxu0
  %523 = vmatprep.mubr.bf16.mxu0 0
  %524 = vmatmul.mubr.bf16.gmra.mrb[0].mxu0 %v429
  %v525 = vpop.f32.mrb[0].mxu0
  %v526 = vadd.f32 0.0, %v525
  %v527 = vpop.f32.mrb[0].mxu0
  %v528 = vpop.f32.mrb[0].mxu0
  %v529 = vadd.f32 0.0, %v528
  %v530 = vpop.f32.mrb[0].mxu0
  %531 = vmatprep.mubr.bf16.mxu0 0
  %532 = vmatmul.mubr.bf16.gmra.mrb[0].mxu0 %v432
  %v533 = vpop.f32.mrb[0].mxu0
  %v534 = vadd.f32 0.0, %v533
  %v535 = vpop.f32.mrb[0].mxu0
  %v536 = vpop.f32.mrb[0].mxu0
  %v537 = vadd.f32 0.0, %v536
  %v538 = vpop.f32.mrb[0].mxu0
  %539 = vmatprep.mubr.bf16.mxu0 0
  %540 = vmatmul.mubr.bf16.gmra.mrb[0].mxu0 %v435
  %v541 = vpop.f32.mrb[0].mxu0
  %v542 = vadd.f32 0.0, %v541
  %v543 = vpop.f32.mrb[0].mxu0
  %v544 = vpop.f32.mrb[0].mxu0
  %v545 = vadd.f32 0.0, %v544
  %v546 = vpop.f32.mrb[0].mxu0
  %547 = vmatprep.mubr.bf16.mxu0 0
  %548 = vmatmul.mubr.bf16.gmra.mrb[0].mxu0 %v438
  %v549 = vpop.f32.mrb[0].mxu0
  %v550 = vadd.f32 0.0, %v549
  %v551 = vpop.f32.mrb[0].mxu0
  %v552 = vpop.f32.mrb[0].mxu0
  %v553 = vadd.f32 0.0, %v552
  %v554 = vpop.f32.mrb[0].mxu0
  %555 = vmatprep.mubr.bf16.mxu0 0
  %556 = vmatmul.mubr.bf16.gmra.mrb[0].mxu0 %v441
  %v557 = vpop.f32.mrb[0].mxu0
  %v558 = vadd.f32 0.0, %v557
  %v559 = vpop.f32.mrb[0].mxu0
  %v560 = vpop.f32.mrb[0].mxu0
  %v561 = vadd.f32 0.0, %v560
  %v562 = vpop.f32.mrb[0].mxu0
  %563 = vmatprep.mubr.bf16.mxu0 0
  %564 = vmatmul.mubr.bf16.gmra.mrb[0].mxu0 %v444
  %v565 = vpop.f32.mrb[0].mxu0
  %v566 = vadd.f32 0.0, %v565
  %v567 = vpop.f32.mrb[0].mxu0
  %v568 = vpop.f32.mrb[0].mxu0
  %v569 = vadd.f32 0.0, %v568
  %v570 = vpop.f32.mrb[0].mxu0
  %571 = vmatprep.mubr.bf16.mxu0 0
  %572 = vmatmul.mubr.bf16.gmra.mrb[0].mxu0 %v447
  %v573 = vpop.f32.mrb[0].mxu0
  %v574 = vadd.f32 0.0, %v573
  %v575 = vpop.f32.mrb[0].mxu0
  %v576 = vpop.f32.mrb[0].mxu0
  %v577 = vadd.f32 0.0, %v576
  %v578 = vpop.f32.mrb[0].mxu0
  %579 = vmatprep.mubr.bf16.mxu0 0
  %580 = vmatmul.mubr.bf16.gmra.mrb[0].mxu0 %v450
  %v581 = vpop.f32.mrb[0].mxu0
  %v582 = vadd.f32 0.0, %v581
  %v583 = vpop.f32.mrb[0].mxu0
  %v584 = vpop.f32.mrb[0].mxu0
  %v585 = vadd.f32 0.0, %v584
  %v586 = vpop.f32.mrb[0].mxu0
  %587 = vmatprep.mubr.bf16.mxu0 0
  %588 = vmatmul.mubr.bf16.gmra.mrb[0].mxu0 %v453
  %v589 = vpop.f32.mrb[0].mxu0
  %v590 = vadd.f32 0.0, %v589
  %v591 = vpop.f32.mrb[0].mxu0
  %v592 = vpop.f32.mrb[0].mxu0
  %v593 = vadd.f32 0.0, %v592
  %v594 = vpop.f32.mrb[0].mxu0
  %595 = vmatprep.mubr.bf16.mxu0 0
  %596 = vmatmul.mubr.bf16.gmra.mrb[0].mxu0 %v456
  %v597 = vpop.f32.mrb[0].mxu0
  %v598 = vadd.f32 0.0, %v597
  %v599 = vpop.f32.mrb[0].mxu0
  %v600 = vpop.f32.mrb[0].mxu0
  %v601 = vadd.f32 0.0, %v600
  %v602 = vpop.f32.mrb[0].mxu0
  %603 = vmatprep.mubr.bf16.mxu0 0
  %604 = vmatmul.mubr.bf16.gmra.mrb[0].mxu0 %v459
  %v605 = vpop.f32.mrb[0].mxu0
  %v606 = vadd.f32 0.0, %v605
  %v607 = vpop.f32.mrb[0].mxu0
  %v608 = vpop.f32.mrb[0].mxu0
  %v609 = vadd.f32 0.0, %v608
  %v610 = vpop.f32.mrb[0].mxu0
  %611 = vmatprep.mubr.bf16.mxu0 0
  %612 = vmatmul.mubr.bf16.gmra.mrb[0].mxu0 %v462
  %v613 = vpop.f32.mrb[0].mxu0
  %v614 = vadd.f32 0.0, %v613
  %v615 = vpop.f32.mrb[0].mxu0
  %v616 = vpop.f32.mrb[0].mxu0
  %v617 = vadd.f32 0.0, %v616
  %v618 = vpop.f32.mrb[0].mxu0
  %619 = vmatprep.mubr.bf16.mxu0 0
  %620 = vmatmul.mubr.bf16.gmra.mrb[0].mxu0 %v465
  %v621 = vpop.f32.mrb[0].mxu0
  %v622 = vadd.f32 0.0, %v621
  %v623 = vpop.f32.mrb[0].mxu0
  %v624 = vpop.f32.mrb[0].mxu0
  %v625 = vadd.f32 0.0, %v624
  %v626 = vpop.f32.mrb[0].mxu0
  %627 = vdwg.mxu0
  %v628 = vmax.f32 %v502, 0.0
  %v629 = vmax.f32 %v505, 0.0
  %v630 = vmax.f32 %v510, 0.0
  %v631 = vmax.f32 %v513, 0.0
  %v632 = vmax.f32 %v518, 0.0
  %v633 = vmax.f32 %v521, 0.0
  %v634 = vmax.f32 %v526, 0.0
  %v635 = vmax.f32 %v529, 0.0
  %v636 = vmax.f32 %v534, 0.0
  %v637 = vmax.f32 %v537, 0.0
  %v638 = vmax.f32 %v542, 0.0
  %v639 = vmax.f32 %v545, 0.0
  %v640 = vmax.f32 %v550, 0.0
  %v641 = vmax.f32 %v553, 0.0
  %v642 = vmax.f32 %v558, 0.0
  %v643 = vmax.f32 %v561, 0.0
  %v644 = vmax.f32 %v566, 0.0
  %v645 = vmax.f32 %v569, 0.0
  %v646 = vmax.f32 %v574, 0.0
  %v647 = vmax.f32 %v577, 0.0
  %v648 = vmax.f32 %v582, 0.0
  %v649 = vmax.f32 %v585, 0.0
  %v650 = vmax.f32 %v590, 0.0
  %v651 = vmax.f32 %v593, 0.0
  %v652 = vmax.f32 %v598, 0.0
  %v653 = vmax.f32 %v601, 0.0
  %v654 = vmax.f32 %v606, 0.0
  %v655 = vmax.f32 %v609, 0.0
  %v656 = vmax.f32 %v614, 0.0
  %v657 = vmax.f32 %v617, 0.0
  %v658 = vmax.f32 %v622, 0.0
  %v659 = vmax.f32 %v625, 0.0
  %v660 = vpack.c.bf16 %v629, %v628
  %v661 = vpack.c.bf16 %v631, %v630
  %v662 = vpack.c.bf16 %v633, %v632
  %v663 = vpack.c.bf16 %v635, %v634
  %v664 = vpack.c.bf16 %v637, %v636
  %v665 = vpack.c.bf16 %v639, %v638
  %v666 = vpack.c.bf16 %v641, %v640
  %v667 = vpack.c.bf16 %v643, %v642
  %v668 = vpack.c.bf16 %v645, %v644
  %v669 = vpack.c.bf16 %v647, %v646
  %v670 = vpack.c.bf16 %v649, %v648
  %v671 = vpack.c.bf16 %v651, %v650
  %v672 = vpack.c.bf16 %v653, %v652
  %v673 = vpack.c.bf16 %v655, %v654
  %v674 = vpack.c.bf16 %v657, %v656
  %v675 = vpack.c.bf16 %v659, %v658
  %v676 = vld [vmem:[%s3] sm:$0xff]
  %v677 = vld [vmem:[%s3 + $0x8] sm:$0xff]
  %v678 = vld [vmem:[%s3 + $0x10] sm:$0xff]
  %v679 = vld [vmem:[%s3 + $0x18] sm:$0xff]
  %v684 = vunpack.c.l.b16 %v676
  %v685 = vunpack.c.h.b16 %v676
  %v686 = vunpack.c.l.b16 %v677
  %v687 = vunpack.c.h.b16 %v677
  %v688 = vunpack.c.l.b16 %v678
  %v689 = vunpack.c.h.b16 %v678
  %v690 = vunpack.c.l.b16 %v679
  %v691 = vunpack.c.h.b16 %v679
  %v692 = vpack.c.b16 %v686, %v684
  %v693 = vpack.c.b16 %v687, %v685
  %v694 = vpack.c.b16 %v690, %v688
  %v695 = vpack.c.b16 %v691, %v689
  %v701 = vsel %vm418, %v660, 0
  %v704 = vsel %vm418, %v661, 0
  %v707 = vsel %vm418, %v662, 0
  %v710 = vsel %vm418, %v663, 0
  %v713 = vsel %vm418, %v664, 0
  %v716 = vsel %vm418, %v665, 0
  %v719 = vsel %vm418, %v666, 0
  %v722 = vsel %vm418, %v667, 0
  %v725 = vsel %vm418, %v668, 0
  %v728 = vsel %vm418, %v669, 0
  %v731 = vsel %vm418, %v670, 0
  %v734 = vsel %vm418, %v671, 0
  %v737 = vsel %vm418, %v672, 0
  %v740 = vsel %vm418, %v673, 0
  %v743 = vsel %vm418, %v674, 0
  %v746 = vsel %vm418, %v675, 0
  %748 = vmatprep.subr.bf16.mxu0 %v693
  %749 = vmatpush1.bf16.msra.mxu0 %v692
  %750 = vmatprep.subr.bf16.mxu0 %v695
  %751 = vmatpush1.bf16.msra.mxu0 %v694
  %752 = vmatprep.subr.bf16.mxu0 0
  %753 = vmatpush1.bf16.msra.mxu0 0
  %754 = vmatprep.subr.bf16.mxu0 0
  %755 = vmatpush1.bf16.msra.mxu0 0
  %756 = vmatprep.subr.bf16.mxu0 0
  %757 = vmatpush1.bf16.msra.mxu0 0
  %758 = vmatprep.subr.bf16.mxu0 0
  %759 = vmatpush1.bf16.msra.mxu0 0
  %760 = vmatprep.subr.bf16.mxu0 0
  %761 = vmatpush1.bf16.msra.mxu0 0
  %762 = vmatprep.subr.bf16.mxu0 0
  %763 = vmatpush1.bf16.msra.mxu0 0
  %764 = vmatprep.subr.bf16.mxu0 0
  %765 = vmatpush1.bf16.msra.mxu0 0
  %766 = vmatprep.subr.bf16.mxu0 0
  %767 = vmatpush1.bf16.msra.mxu0 0
  %768 = vmatprep.subr.bf16.mxu0 0
  %769 = vmatpush1.bf16.msra.mxu0 0
  %770 = vmatprep.subr.bf16.mxu0 0
  %771 = vmatpush1.bf16.msra.mxu0 0
  %772 = vmatprep.subr.bf16.mxu0 0
  %773 = vmatpush1.bf16.msra.mxu0 0
  %774 = vmatprep.subr.bf16.mxu0 0
  %775 = vmatpush1.bf16.msra.mxu0 0
  %776 = vmatprep.subr.bf16.mxu0 0
  %777 = vmatpush1.bf16.msra.mxu0 0
  %778 = vmatprep.subr.bf16.mxu0 0
  %779 = vmatpush1.bf16.msra.mxu0 0
  %780 = vmatprep.mubr.bf16.mxu0 0
  %781 = vmatmul.mubr.bf16.gmra.mrb[0].mxu0 %v701
  %v782 = vpop.f32.mrb[0].mxu0
  %v783 = vadd.f32 0.0, %v782
  %v784 = vpop.f32.mrb[0].mxu0
  %v785 = vadd.f32 0.0, %v784
  %v786 = vpop.f32.mrb[0].mxu0
  %v787 = vadd.f32 0.0, %v786
  %v788 = vpop.f32.mrb[0].mxu0
  %v789 = vadd.f32 0.0, %v788
  %790 = vmatprep.mubr.bf16.mxu0 0
  %791 = vmatmul.mubr.bf16.gmra.mrb[0].mxu0 %v704
  %v792 = vpop.f32.mrb[0].mxu0
  %v793 = vadd.f32 0.0, %v792
  %v794 = vpop.f32.mrb[0].mxu0
  %v795 = vadd.f32 0.0, %v794
  %v796 = vpop.f32.mrb[0].mxu0
  %v797 = vadd.f32 0.0, %v796
  %v798 = vpop.f32.mrb[0].mxu0
  %v799 = vadd.f32 0.0, %v798
  %800 = vmatprep.mubr.bf16.mxu0 0
  %801 = vmatmul.mubr.bf16.gmra.mrb[0].mxu0 %v707
  %v802 = vpop.f32.mrb[0].mxu0
  %v803 = vadd.f32 0.0, %v802
  %v804 = vpop.f32.mrb[0].mxu0
  %v805 = vadd.f32 0.0, %v804
  %v806 = vpop.f32.mrb[0].mxu0
  %v807 = vadd.f32 0.0, %v806
  %v808 = vpop.f32.mrb[0].mxu0
  %v809 = vadd.f32 0.0, %v808
  %810 = vmatprep.mubr.bf16.mxu0 0
  %811 = vmatmul.mubr.bf16.gmra.mrb[0].mxu0 %v710
  %v812 = vpop.f32.mrb[0].mxu0
  %v813 = vadd.f32 0.0, %v812
  %v814 = vpop.f32.mrb[0].mxu0
  %v815 = vadd.f32 0.0, %v814
  %v816 = vpop.f32.mrb[0].mxu0
  %v817 = vadd.f32 0.0, %v816
  %v818 = vpop.f32.mrb[0].mxu0
  %v819 = vadd.f32 0.0, %v818
  %820 = vmatprep.mubr.bf16.mxu0 0
  %821 = vmatmul.mubr.bf16.gmra.mrb[0].mxu0 %v713
  %v822 = vpop.f32.mrb[0].mxu0
  %v823 = vadd.f32 0.0, %v822
  %v824 = vpop.f32.mrb[0].mxu0
  %v825 = vadd.f32 0.0, %v824
  %v826 = vpop.f32.mrb[0].mxu0
  %v827 = vadd.f32 0.0, %v826
  %v828 = vpop.f32.mrb[0].mxu0
  %v829 = vadd.f32 0.0, %v828
  %830 = vmatprep.mubr.bf16.mxu0 0
  %831 = vmatmul.mubr.bf16.gmra.mrb[0].mxu0 %v716
  %v832 = vpop.f32.mrb[0].mxu0
  %v833 = vadd.f32 0.0, %v832
  %v834 = vpop.f32.mrb[0].mxu0
  %v835 = vadd.f32 0.0, %v834
  %v836 = vpop.f32.mrb[0].mxu0
  %v837 = vadd.f32 0.0, %v836
  %v838 = vpop.f32.mrb[0].mxu0
  %v839 = vadd.f32 0.0, %v838
  %840 = vmatprep.mubr.bf16.mxu0 0
  %841 = vmatmul.mubr.bf16.gmra.mrb[0].mxu0 %v719
  %v842 = vpop.f32.mrb[0].mxu0
  %v843 = vadd.f32 0.0, %v842
  %v844 = vpop.f32.mrb[0].mxu0
  %v845 = vadd.f32 0.0, %v844
  %v846 = vpop.f32.mrb[0].mxu0
  %v847 = vadd.f32 0.0, %v846
  %v848 = vpop.f32.mrb[0].mxu0
  %v849 = vadd.f32 0.0, %v848
  %850 = vmatprep.mubr.bf16.mxu0 0
  %851 = vmatmul.mubr.bf16.gmra.mrb[0].mxu0 %v722
  %v852 = vpop.f32.mrb[0].mxu0
  %v853 = vadd.f32 0.0, %v852
  %v854 = vpop.f32.mrb[0].mxu0
  %v855 = vadd.f32 0.0, %v854
  %v856 = vpop.f32.mrb[0].mxu0
  %v857 = vadd.f32 0.0, %v856
  %v858 = vpop.f32.mrb[0].mxu0
  %v859 = vadd.f32 0.0, %v858
  %860 = vmatprep.mubr.bf16.mxu0 0
  %861 = vmatmul.mubr.bf16.gmra.mrb[0].mxu0 %v725
  %v862 = vpop.f32.mrb[0].mxu0
  %v863 = vadd.f32 0.0, %v862
  %v864 = vpop.f32.mrb[0].mxu0
  %v865 = vadd.f32 0.0, %v864
  %v866 = vpop.f32.mrb[0].mxu0
  %v867 = vadd.f32 0.0, %v866
  %v868 = vpop.f32.mrb[0].mxu0
  %v869 = vadd.f32 0.0, %v868
  %870 = vmatprep.mubr.bf16.mxu0 0
  %871 = vmatmul.mubr.bf16.gmra.mrb[0].mxu0 %v728
  %v872 = vpop.f32.mrb[0].mxu0
  %v873 = vadd.f32 0.0, %v872
  %v874 = vpop.f32.mrb[0].mxu0
  %v875 = vadd.f32 0.0, %v874
  %v876 = vpop.f32.mrb[0].mxu0
  %v877 = vadd.f32 0.0, %v876
  %v878 = vpop.f32.mrb[0].mxu0
  %v879 = vadd.f32 0.0, %v878
  %880 = vmatprep.mubr.bf16.mxu0 0
  %881 = vmatmul.mubr.bf16.gmra.mrb[0].mxu0 %v731
  %v882 = vpop.f32.mrb[0].mxu0
  %v883 = vadd.f32 0.0, %v882
  %v884 = vpop.f32.mrb[0].mxu0
  %v885 = vadd.f32 0.0, %v884
  %v886 = vpop.f32.mrb[0].mxu0
  %v887 = vadd.f32 0.0, %v886
  %v888 = vpop.f32.mrb[0].mxu0
  %v889 = vadd.f32 0.0, %v888
  %890 = vmatprep.mubr.bf16.mxu0 0
  %891 = vmatmul.mubr.bf16.gmra.mrb[0].mxu0 %v734
  %v892 = vpop.f32.mrb[0].mxu0
  %v893 = vadd.f32 0.0, %v892
  %v894 = vpop.f32.mrb[0].mxu0
  %v895 = vadd.f32 0.0, %v894
  %v896 = vpop.f32.mrb[0].mxu0
  %v897 = vadd.f32 0.0, %v896
  %v898 = vpop.f32.mrb[0].mxu0
  %v899 = vadd.f32 0.0, %v898
  %900 = vmatprep.mubr.bf16.mxu0 0
  %901 = vmatmul.mubr.bf16.gmra.mrb[0].mxu0 %v737
  %v902 = vpop.f32.mrb[0].mxu0
  %v903 = vadd.f32 0.0, %v902
  %v904 = vpop.f32.mrb[0].mxu0
  %v905 = vadd.f32 0.0, %v904
  %v906 = vpop.f32.mrb[0].mxu0
  %v907 = vadd.f32 0.0, %v906
  %v908 = vpop.f32.mrb[0].mxu0
  %v909 = vadd.f32 0.0, %v908
  %910 = vmatprep.mubr.bf16.mxu0 0
  %911 = vmatmul.mubr.bf16.gmra.mrb[0].mxu0 %v740
  %v912 = vpop.f32.mrb[0].mxu0
  %v913 = vadd.f32 0.0, %v912
  %v914 = vpop.f32.mrb[0].mxu0
  %v915 = vadd.f32 0.0, %v914
  %v916 = vpop.f32.mrb[0].mxu0
  %v917 = vadd.f32 0.0, %v916
  %v918 = vpop.f32.mrb[0].mxu0
  %v919 = vadd.f32 0.0, %v918
  %920 = vmatprep.mubr.bf16.mxu0 0
  %921 = vmatmul.mubr.bf16.gmra.mrb[0].mxu0 %v743
  %v922 = vpop.f32.mrb[0].mxu0
  %v923 = vadd.f32 0.0, %v922
  %v924 = vpop.f32.mrb[0].mxu0
  %v925 = vadd.f32 0.0, %v924
  %v926 = vpop.f32.mrb[0].mxu0
  %v927 = vadd.f32 0.0, %v926
  %v928 = vpop.f32.mrb[0].mxu0
  %v929 = vadd.f32 0.0, %v928
  %930 = vmatprep.mubr.bf16.mxu0 0
  %931 = vmatmul.mubr.bf16.gmra.mrb[0].mxu0 %v746
  %v932 = vpop.f32.mrb[0].mxu0
  %v933 = vadd.f32 0.0, %v932
  %v934 = vpop.f32.mrb[0].mxu0
  %v935 = vadd.f32 0.0, %v934
  %v936 = vpop.f32.mrb[0].mxu0
  %v937 = vadd.f32 0.0, %v936
  %v938 = vpop.f32.mrb[0].mxu0
  %v939 = vadd.f32 0.0, %v938
  %940 = vdwg.mxu0
  %v941 = vmax.f32 %v783, 0.0
  %v942 = vmax.f32 %v785, 0.0
  %v943 = vmax.f32 %v787, 0.0
  %v944 = vmax.f32 %v789, 0.0
  %v945 = vmax.f32 %v793, 0.0
  %v946 = vmax.f32 %v795, 0.0
  %v947 = vmax.f32 %v797, 0.0
  %v948 = vmax.f32 %v799, 0.0
  %v949 = vmax.f32 %v803, 0.0
  %v950 = vmax.f32 %v805, 0.0
  %v951 = vmax.f32 %v807, 0.0
  %v952 = vmax.f32 %v809, 0.0
  %v953 = vmax.f32 %v813, 0.0
  %v954 = vmax.f32 %v815, 0.0
  %v955 = vmax.f32 %v817, 0.0
  %v956 = vmax.f32 %v819, 0.0
  %v957 = vmax.f32 %v823, 0.0
  %v958 = vmax.f32 %v825, 0.0
  %v959 = vmax.f32 %v827, 0.0
  %v960 = vmax.f32 %v829, 0.0
  %v961 = vmax.f32 %v833, 0.0
  %v962 = vmax.f32 %v835, 0.0
  %v963 = vmax.f32 %v837, 0.0
  %v964 = vmax.f32 %v839, 0.0
  %v965 = vmax.f32 %v843, 0.0
  %v966 = vmax.f32 %v845, 0.0
  %v967 = vmax.f32 %v847, 0.0
  %v968 = vmax.f32 %v849, 0.0
  %v969 = vmax.f32 %v853, 0.0
  %v970 = vmax.f32 %v855, 0.0
  %v971 = vmax.f32 %v857, 0.0
  %v972 = vmax.f32 %v859, 0.0
  %v973 = vmax.f32 %v863, 0.0
  %v974 = vmax.f32 %v865, 0.0
  %v975 = vmax.f32 %v867, 0.0
  %v976 = vmax.f32 %v869, 0.0
  %v977 = vmax.f32 %v873, 0.0
  %v978 = vmax.f32 %v875, 0.0
  %v979 = vmax.f32 %v877, 0.0
  %v980 = vmax.f32 %v879, 0.0
  %v981 = vmax.f32 %v883, 0.0
  %v982 = vmax.f32 %v885, 0.0
  %v983 = vmax.f32 %v887, 0.0
  %v984 = vmax.f32 %v889, 0.0
  %v985 = vmax.f32 %v893, 0.0
  %v986 = vmax.f32 %v895, 0.0
  %v987 = vmax.f32 %v897, 0.0
  %v988 = vmax.f32 %v899, 0.0
  %v989 = vmax.f32 %v903, 0.0
  %v990 = vmax.f32 %v905, 0.0
  %v991 = vmax.f32 %v907, 0.0
  %v992 = vmax.f32 %v909, 0.0
  %v993 = vmax.f32 %v913, 0.0
  %v994 = vmax.f32 %v915, 0.0
  %v995 = vmax.f32 %v917, 0.0
  %v996 = vmax.f32 %v919, 0.0
  %v997 = vmax.f32 %v923, 0.0
  %v998 = vmax.f32 %v925, 0.0
  %v999 = vmax.f32 %v927, 0.0
  %v1000 = vmax.f32 %v929, 0.0
  %v1001 = vmax.f32 %v933, 0.0
  %v1002 = vmax.f32 %v935, 0.0
  %v1003 = vmax.f32 %v937, 0.0
  %v1004 = vmax.f32 %v939, 0.0
  %v1005 = vpack.c.bf16 %v943, %v941
  %v1006 = vpack.c.bf16 %v944, %v942
  %v1007 = vpack.c.bf16 %v947, %v945
  %v1008 = vpack.c.bf16 %v948, %v946
  %v1009 = vpack.c.bf16 %v951, %v949
  %v1010 = vpack.c.bf16 %v952, %v950
  %v1011 = vpack.c.bf16 %v955, %v953
  %v1012 = vpack.c.bf16 %v956, %v954
  %v1013 = vpack.c.bf16 %v959, %v957
  %v1014 = vpack.c.bf16 %v960, %v958
  %v1015 = vpack.c.bf16 %v963, %v961
  %v1016 = vpack.c.bf16 %v964, %v962
  %v1017 = vpack.c.bf16 %v967, %v965
  %v1018 = vpack.c.bf16 %v968, %v966
  %v1019 = vpack.c.bf16 %v971, %v969
  %v1020 = vpack.c.bf16 %v972, %v970
  %v1021 = vpack.c.bf16 %v975, %v973
  %v1022 = vpack.c.bf16 %v976, %v974
  %v1023 = vpack.c.bf16 %v979, %v977
  %v1024 = vpack.c.bf16 %v980, %v978
  %v1025 = vpack.c.bf16 %v983, %v981
  %v1026 = vpack.c.bf16 %v984, %v982
  %v1027 = vpack.c.bf16 %v987, %v985
  %v1028 = vpack.c.bf16 %v988, %v986
  %v1029 = vpack.c.bf16 %v991, %v989
  %v1030 = vpack.c.bf16 %v992, %v990
  %v1031 = vpack.c.bf16 %v995, %v993
  %v1032 = vpack.c.bf16 %v996, %v994
  %v1033 = vpack.c.bf16 %v999, %v997
  %v1034 = vpack.c.bf16 %v1000, %v998
  %v1035 = vpack.c.bf16 %v1003, %v1001
  %v1036 = vpack.c.bf16 %v1004, %v1002
  %v1037 = vld [vmem:[%s4] sm:$0xff]
  %v1038 = vld [vmem:[%s4 + $0x8] sm:$0xff]
  %v1039 = vld [vmem:[%s4 + $0x10] sm:$0xff]
  %v1040 = vld [vmem:[%s4 + $0x18] sm:$0xff]
  %v1041 = vld [vmem:[%s4 + $0x20] sm:$0xff]
  %v1042 = vld [vmem:[%s4 + $0x28] sm:$0xff]
  %v1043 = vld [vmem:[%s4 + $0x30] sm:$0xff]
  %v1044 = vld [vmem:[%s4 + $0x38] sm:$0xff]
  %v1045 = vld [vmem:[%s4 + $0x40] sm:$0xff]
  %v1046 = vld [vmem:[%s4 + $0x48] sm:$0xff]
  %v1047 = vld [vmem:[%s4 + $0x50] sm:$0xff]
  %v1048 = vld [vmem:[%s4 + $0x58] sm:$0xff]
  %v1049 = vld [vmem:[%s4 + $0x60] sm:$0xff]
  %v1050 = vld [vmem:[%s4 + $0x68] sm:$0xff]
  %v1051 = vld [vmem:[%s4 + $0x70] sm:$0xff]
  %v1052 = vld [vmem:[%s4 + $0x78] sm:$0xff]
  %v1053 = vld [vmem:[%s4 + $0x80] sm:$0xff]
  %v1054 = vld [vmem:[%s4 + $0x88] sm:$0xff]
  %v1055 = vld [vmem:[%s4 + $0x90] sm:$0xff]
  %v1056 = vld [vmem:[%s4 + $0x98] sm:$0xff]
  %v1077 = vunpack.c.l.b16 %v1037
  %v1078 = vunpack.c.h.b16 %v1037
  %v1079 = vunpack.c.l.b16 %v1038
  %v1080 = vunpack.c.h.b16 %v1038
  %v1081 = vunpack.c.l.b16 %v1039
  %v1082 = vunpack.c.h.b16 %v1039
  %v1083 = vunpack.c.l.b16 %v1040
  %v1084 = vunpack.c.h.b16 %v1040
  %v1085 = vunpack.c.l.b16 %v1041
  %v1086 = vunpack.c.h.b16 %v1041
  %v1087 = vunpack.c.l.b16 %v1042
  %v1088 = vunpack.c.h.b16 %v1042
  %v1089 = vunpack.c.l.b16 %v1043
  %v1090 = vunpack.c.h.b16 %v1043
  %v1091 = vunpack.c.l.b16 %v1044
  %v1092 = vunpack.c.h.b16 %v1044
  %v1093 = vunpack.c.l.b16 %v1045
  %v1094 = vunpack.c.h.b16 %v1045
  %v1095 = vunpack.c.l.b16 %v1046
  %v1096 = vunpack.c.h.b16 %v1046
  %v1097 = vunpack.c.l.b16 %v1047
  %v1098 = vunpack.c.h.b16 %v1047
  %v1099 = vunpack.c.l.b16 %v1048
  %v1100 = vunpack.c.h.b16 %v1048
  %v1101 = vunpack.c.l.b16 %v1049
  %v1102 = vunpack.c.h.b16 %v1049
  %v1103 = vunpack.c.l.b16 %v1050
  %v1104 = vunpack.c.h.b16 %v1050
  %v1105 = vunpack.c.l.b16 %v1051
  %v1106 = vunpack.c.h.b16 %v1051
  %v1107 = vunpack.c.l.b16 %v1052
  %v1108 = vunpack.c.h.b16 %v1052
  %v1109 = vunpack.c.l.b16 %v1053
  %v1110 = vunpack.c.h.b16 %v1053
  %v1111 = vunpack.c.l.b16 %v1054
  %v1112 = vunpack.c.h.b16 %v1054
  %v1113 = vunpack.c.l.b16 %v1055
  %v1114 = vunpack.c.h.b16 %v1055
  %v1115 = vunpack.c.l.b16 %v1056
  %v1116 = vunpack.c.h.b16 %v1056
  %v1117 = vpack.c.b16 %v1079, %v1077
  %v1118 = vpack.c.b16 %v1080, %v1078
  %v1119 = vpack.c.b16 %v1083, %v1081
  %v1120 = vpack.c.b16 %v1084, %v1082
  %v1121 = vpack.c.b16 %v1087, %v1085
  %v1122 = vpack.c.b16 %v1088, %v1086
  %v1123 = vpack.c.b16 %v1091, %v1089
  %v1124 = vpack.c.b16 %v1092, %v1090
  %v1125 = vpack.c.b16 %v1095, %v1093
  %v1126 = vpack.c.b16 %v1096, %v1094
  %v1127 = vpack.c.b16 %v1099, %v1097
  %v1128 = vpack.c.b16 %v1100, %v1098
  %v1129 = vpack.c.b16 %v1103, %v1101
  %v1130 = vpack.c.b16 %v1104, %v1102
  %v1131 = vpack.c.b16 %v1107, %v1105
  %v1132 = vpack.c.b16 %v1108, %v1106
  %v1133 = vpack.c.b16 %v1111, %v1109
  %v1134 = vpack.c.b16 %v1112, %v1110
  %v1135 = vpack.c.b16 %v1115, %v1113
  %v1136 = vpack.c.b16 %v1116, %v1114
  %v1158 = vsel %vm418, %v1006, 0
  %v1161 = vsel %vm418, %v1008, 0
  %v1164 = vsel %vm418, %v1010, 0
  %v1167 = vsel %vm418, %v1012, 0
  %v1170 = vsel %vm418, %v1014, 0
  %v1173 = vsel %vm418, %v1016, 0
  %v1176 = vsel %vm418, %v1018, 0
  %v1179 = vsel %vm418, %v1020, 0
  %v1182 = vsel %vm418, %v1022, 0
  %v1185 = vsel %vm418, %v1024, 0
  %v1188 = vsel %vm418, %v1026, 0
  %v1191 = vsel %vm418, %v1028, 0
  %v1194 = vsel %vm418, %v1030, 0
  %v1197 = vsel %vm418, %v1032, 0
  %v1200 = vsel %vm418, %v1034, 0
  %v1203 = vsel %vm418, %v1036, 0
  %1205 = vmatprep.subr.bf16.mxu0 %v1118
  %1206 = vmatpush1.bf16.msra.mxu0 %v1117
  %1207 = vmatprep.subr.bf16.mxu0 %v1120
  %1208 = vmatpush1.bf16.msra.mxu0 %v1119
  %1209 = vmatprep.subr.bf16.mxu0 %v1122
  %1210 = vmatpush1.bf16.msra.mxu0 %v1121
  %1211 = vmatprep.subr.bf16.mxu0 %v1124
  %1212 = vmatpush1.bf16.msra.mxu0 %v1123
  %1213 = vmatprep.subr.bf16.mxu0 %v1126
  %1214 = vmatpush1.bf16.msra.mxu0 %v1125
  %1215 = vmatprep.subr.bf16.mxu0 %v1128
  %1216 = vmatpush1.bf16.msra.mxu0 %v1127
  %1217 = vmatprep.subr.bf16.mxu0 %v1130
  %1218 = vmatpush1.bf16.msra.mxu0 %v1129
  %1219 = vmatprep.subr.bf16.mxu0 %v1132
  %1220 = vmatpush1.bf16.msra.mxu0 %v1131
  %1221 = vmatprep.subr.bf16.mxu0 %v1134
  %1222 = vmatpush1.bf16.msra.mxu0 %v1133
  %1223 = vmatprep.subr.bf16.mxu0 %v1136
  %1224 = vmatpush1.bf16.msra.mxu0 %v1135
  %1225 = vmatprep.subr.bf16.mxu0 0
  %1226 = vmatpush1.bf16.msra.mxu0 0
  %1227 = vmatprep.subr.bf16.mxu0 0
  %1228 = vmatpush1.bf16.msra.mxu0 0
  %1229 = vmatprep.subr.bf16.mxu0 0
  %1230 = vmatpush1.bf16.msra.mxu0 0
  %1231 = vmatprep.subr.bf16.mxu0 0
  %1232 = vmatpush1.bf16.msra.mxu0 0
  %1233 = vmatprep.subr.bf16.mxu0 0
  %1234 = vmatpush1.bf16.msra.mxu0 0
  %1235 = vmatprep.subr.bf16.mxu0 0
  %1236 = vmatpush1.bf16.msra.mxu0 0
  %1237 = vmatprep.mubr.bf16.mxu0 %v1158
  %1238 = vmatmul.mubr.bf16.gmra.mrb[0].mxu0 %v1005
  %v1239 = vpop.f32.mrb[0].mxu0
  %v1240 = vadd.f32 0.0, %v1239
  %v1241 = vpop.f32.mrb[0].mxu0
  %v1242 = vadd.f32 0.0, %v1241
  %v1243 = vpop.f32.mrb[0].mxu0
  %v1244 = vadd.f32 0.0, %v1243
  %v1245 = vpop.f32.mrb[0].mxu0
  %v1246 = vadd.f32 0.0, %v1245
  %1247 = vmatprep.mubr.bf16.mxu0 %v1161
  %1248 = vmatmul.mubr.bf16.gmra.mrb[0].mxu0 %v1007
  %v1249 = vpop.f32.mrb[0].mxu0
  %v1250 = vadd.f32 0.0, %v1249
  %v1251 = vpop.f32.mrb[0].mxu0
  %v1252 = vadd.f32 0.0, %v1251
  %v1253 = vpop.f32.mrb[0].mxu0
  %v1254 = vadd.f32 0.0, %v1253
  %v1255 = vpop.f32.mrb[0].mxu0
  %v1256 = vadd.f32 0.0, %v1255
  %1257 = vmatprep.mubr.bf16.mxu0 %v1164
  %1258 = vmatmul.mubr.bf16.gmra.mrb[0].mxu0 %v1009
  %v1259 = vpop.f32.mrb[0].mxu0
  %v1260 = vadd.f32 0.0, %v1259
  %v1261 = vpop.f32.mrb[0].mxu0
  %v1262 = vadd.f32 0.0, %v1261
  %v1263 = vpop.f32.mrb[0].mxu0
  %v1264 = vadd.f32 0.0, %v1263
  %v1265 = vpop.f32.mrb[0].mxu0
  %v1266 = vadd.f32 0.0, %v1265
  %1267 = vmatprep.mubr.bf16.mxu0 %v1167
  %1268 = vmatmul.mubr.bf16.gmra.mrb[0].mxu0 %v1011
  %v1269 = vpop.f32.mrb[0].mxu0
  %v1270 = vadd.f32 0.0, %v1269
  %v1271 = vpop.f32.mrb[0].mxu0
  %v1272 = vadd.f32 0.0, %v1271
  %v1273 = vpop.f32.mrb[0].mxu0
  %v1274 = vadd.f32 0.0, %v1273
  %v1275 = vpop.f32.mrb[0].mxu0
  %v1276 = vadd.f32 0.0, %v1275
  %1277 = vmatprep.mubr.bf16.mxu0 %v1170
  %1278 = vmatmul.mubr.bf16.gmra.mrb[0].mxu0 %v1013
  %v1279 = vpop.f32.mrb[0].mxu0
  %v1280 = vadd.f32 0.0, %v1279
  %v1281 = vpop.f32.mrb[0].mxu0
  %v1282 = vadd.f32 0.0, %v1281
  %v1283 = vpop.f32.mrb[0].mxu0
  %v1284 = vadd.f32 0.0, %v1283
  %v1285 = vpop.f32.mrb[0].mxu0
  %v1286 = vadd.f32 0.0, %v1285
  %1287 = vmatprep.mubr.bf16.mxu0 %v1173
  %1288 = vmatmul.mubr.bf16.gmra.mrb[0].mxu0 %v1015
  %v1289 = vpop.f32.mrb[0].mxu0
  %v1290 = vadd.f32 0.0, %v1289
  %v1291 = vpop.f32.mrb[0].mxu0
  %v1292 = vadd.f32 0.0, %v1291
  %v1293 = vpop.f32.mrb[0].mxu0
  %v1294 = vadd.f32 0.0, %v1293
  %v1295 = vpop.f32.mrb[0].mxu0
  %v1296 = vadd.f32 0.0, %v1295
  %1297 = vmatprep.mubr.bf16.mxu0 %v1176
  %1298 = vmatmul.mubr.bf16.gmra.mrb[0].mxu0 %v1017
  %v1299 = vpop.f32.mrb[0].mxu0
  %v1300 = vadd.f32 0.0, %v1299
  %v1301 = vpop.f32.mrb[0].mxu0
  %v1302 = vadd.f32 0.0, %v1301
  %v1303 = vpop.f32.mrb[0].mxu0
  %v1304 = vadd.f32 0.0, %v1303
  %v1305 = vpop.f32.mrb[0].mxu0
  %v1306 = vadd.f32 0.0, %v1305
  %1307 = vmatprep.mubr.bf16.mxu0 %v1179
  %1308 = vmatmul.mubr.bf16.gmra.mrb[0].mxu0 %v1019
  %v1309 = vpop.f32.mrb[0].mxu0
  %v1310 = vadd.f32 0.0, %v1309
  %v1311 = vpop.f32.mrb[0].mxu0
  %v1312 = vadd.f32 0.0, %v1311
  %v1313 = vpop.f32.mrb[0].mxu0
  %v1314 = vadd.f32 0.0, %v1313
  %v1315 = vpop.f32.mrb[0].mxu0
  %v1316 = vadd.f32 0.0, %v1315
  %1317 = vmatprep.mubr.bf16.mxu0 %v1182
  %1318 = vmatmul.mubr.bf16.gmra.mrb[0].mxu0 %v1021
  %v1319 = vpop.f32.mrb[0].mxu0
  %v1320 = vadd.f32 0.0, %v1319
  %v1321 = vpop.f32.mrb[0].mxu0
  %v1322 = vadd.f32 0.0, %v1321
  %v1323 = vpop.f32.mrb[0].mxu0
  %v1324 = vadd.f32 0.0, %v1323
  %v1325 = vpop.f32.mrb[0].mxu0
  %v1326 = vadd.f32 0.0, %v1325
  %1327 = vmatprep.mubr.bf16.mxu0 %v1185
  %1328 = vmatmul.mubr.bf16.gmra.mrb[0].mxu0 %v1023
  %v1329 = vpop.f32.mrb[0].mxu0
  %v1330 = vadd.f32 0.0, %v1329
  %v1331 = vpop.f32.mrb[0].mxu0
  %v1332 = vadd.f32 0.0, %v1331
  %v1333 = vpop.f32.mrb[0].mxu0
  %v1334 = vadd.f32 0.0, %v1333
  %v1335 = vpop.f32.mrb[0].mxu0
  %v1336 = vadd.f32 0.0, %v1335
  %1337 = vmatprep.mubr.bf16.mxu0 %v1188
  %1338 = vmatmul.mubr.bf16.gmra.mrb[0].mxu0 %v1025
  %v1339 = vpop.f32.mrb[0].mxu0
  %v1340 = vadd.f32 0.0, %v1339
  %v1341 = vpop.f32.mrb[0].mxu0
  %v1342 = vadd.f32 0.0, %v1341
  %v1343 = vpop.f32.mrb[0].mxu0
  %v1344 = vadd.f32 0.0, %v1343
  %v1345 = vpop.f32.mrb[0].mxu0
  %v1346 = vadd.f32 0.0, %v1345
  %1347 = vmatprep.mubr.bf16.mxu0 %v1191
  %1348 = vmatmul.mubr.bf16.gmra.mrb[0].mxu0 %v1027
  %v1349 = vpop.f32.mrb[0].mxu0
  %v1350 = vadd.f32 0.0, %v1349
  %v1351 = vpop.f32.mrb[0].mxu0
  %v1352 = vadd.f32 0.0, %v1351
  %v1353 = vpop.f32.mrb[0].mxu0
  %v1354 = vadd.f32 0.0, %v1353
  %v1355 = vpop.f32.mrb[0].mxu0
  %v1356 = vadd.f32 0.0, %v1355
  %1357 = vmatprep.mubr.bf16.mxu0 %v1194
  %1358 = vmatmul.mubr.bf16.gmra.mrb[0].mxu0 %v1029
  %v1359 = vpop.f32.mrb[0].mxu0
  %v1360 = vadd.f32 0.0, %v1359
  %v1361 = vpop.f32.mrb[0].mxu0
  %v1362 = vadd.f32 0.0, %v1361
  %v1363 = vpop.f32.mrb[0].mxu0
  %v1364 = vadd.f32 0.0, %v1363
  %v1365 = vpop.f32.mrb[0].mxu0
  %v1366 = vadd.f32 0.0, %v1365
  %1367 = vmatprep.mubr.bf16.mxu0 %v1197
  %1368 = vmatmul.mubr.bf16.gmra.mrb[0].mxu0 %v1031
  %v1369 = vpop.f32.mrb[0].mxu0
  %v1370 = vadd.f32 0.0, %v1369
  %v1371 = vpop.f32.mrb[0].mxu0
  %v1372 = vadd.f32 0.0, %v1371
  %v1373 = vpop.f32.mrb[0].mxu0
  %v1374 = vadd.f32 0.0, %v1373
  %v1375 = vpop.f32.mrb[0].mxu0
  %v1376 = vadd.f32 0.0, %v1375
  %1377 = vmatprep.mubr.bf16.mxu0 %v1200
  %1378 = vmatmul.mubr.bf16.gmra.mrb[0].mxu0 %v1033
  %v1379 = vpop.f32.mrb[0].mxu0
  %v1380 = vadd.f32 0.0, %v1379
  %v1381 = vpop.f32.mrb[0].mxu0
  %v1382 = vadd.f32 0.0, %v1381
  %v1383 = vpop.f32.mrb[0].mxu0
  %v1384 = vadd.f32 0.0, %v1383
  %v1385 = vpop.f32.mrb[0].mxu0
  %v1386 = vadd.f32 0.0, %v1385
  %1387 = vmatprep.mubr.bf16.mxu0 %v1203
  %1388 = vmatmul.mubr.bf16.gmra.mrb[0].mxu0 %v1035
  %v1389 = vpop.f32.mrb[0].mxu0
  %v1390 = vadd.f32 0.0, %v1389
  %v1391 = vpop.f32.mrb[0].mxu0
  %v1392 = vadd.f32 0.0, %v1391
  %v1393 = vpop.f32.mrb[0].mxu0
  %v1394 = vadd.f32 0.0, %v1393
  %v1395 = vpop.f32.mrb[0].mxu0
  %v1396 = vadd.f32 0.0, %v1395
  %1397 = vdwg.mxu0
  %v1398 = vmax.f32 %v1240, 0.0
  %v1399 = vmax.f32 %v1242, 0.0
  %v1400 = vmax.f32 %v1244, 0.0
  %v1401 = vmax.f32 %v1246, 0.0
  %v1402 = vmax.f32 %v1250, 0.0
  %v1403 = vmax.f32 %v1252, 0.0
  %v1404 = vmax.f32 %v1254, 0.0
  %v1405 = vmax.f32 %v1256, 0.0
  %v1406 = vmax.f32 %v1260, 0.0
  %v1407 = vmax.f32 %v1262, 0.0
  %v1408 = vmax.f32 %v1264, 0.0
  %v1409 = vmax.f32 %v1266, 0.0
  %v1410 = vmax.f32 %v1270, 0.0
  %v1411 = vmax.f32 %v1272, 0.0
  %v1412 = vmax.f32 %v1274, 0.0
  %v1413 = vmax.f32 %v1276, 0.0
  %v1414 = vmax.f32 %v1280, 0.0
  %v1415 = vmax.f32 %v1282, 0.0
  %v1416 = vmax.f32 %v1284, 0.0
  %v1417 = vmax.f32 %v1286, 0.0
  %v1418 = vmax.f32 %v1290, 0.0
  %v1419 = vmax.f32 %v1292, 0.0
  %v1420 = vmax.f32 %v1294, 0.0
  %v1421 = vmax.f32 %v1296, 0.0
  %v1422 = vmax.f32 %v1300, 0.0
  %v1423 = vmax.f32 %v1302, 0.0
  %v1424 = vmax.f32 %v1304, 0.0
  %v1425 = vmax.f32 %v1306, 0.0
  %v1426 = vmax.f32 %v1310, 0.0
  %v1427 = vmax.f32 %v1312, 0.0
  %v1428 = vmax.f32 %v1314, 0.0
  %v1429 = vmax.f32 %v1316, 0.0
  %v1430 = vmax.f32 %v1320, 0.0
  %v1431 = vmax.f32 %v1322, 0.0
  %v1432 = vmax.f32 %v1324, 0.0
  %v1433 = vmax.f32 %v1326, 0.0
  %v1434 = vmax.f32 %v1330, 0.0
  %v1435 = vmax.f32 %v1332, 0.0
  %v1436 = vmax.f32 %v1334, 0.0
  %v1437 = vmax.f32 %v1336, 0.0
  %v1438 = vmax.f32 %v1340, 0.0
  %v1439 = vmax.f32 %v1342, 0.0
  %v1440 = vmax.f32 %v1344, 0.0
  %v1441 = vmax.f32 %v1346, 0.0
  %v1442 = vmax.f32 %v1350, 0.0
  %v1443 = vmax.f32 %v1352, 0.0
  %v1444 = vmax.f32 %v1354, 0.0
  %v1445 = vmax.f32 %v1356, 0.0
  %v1446 = vmax.f32 %v1360, 0.0
  %v1447 = vmax.f32 %v1362, 0.0
  %v1448 = vmax.f32 %v1364, 0.0
  %v1449 = vmax.f32 %v1366, 0.0
  %v1450 = vmax.f32 %v1370, 0.0
  %v1451 = vmax.f32 %v1372, 0.0
  %v1452 = vmax.f32 %v1374, 0.0
  %v1453 = vmax.f32 %v1376, 0.0
  %v1454 = vmax.f32 %v1380, 0.0
  %v1455 = vmax.f32 %v1382, 0.0
  %v1456 = vmax.f32 %v1384, 0.0
  %v1457 = vmax.f32 %v1386, 0.0
  %v1458 = vmax.f32 %v1390, 0.0
  %v1459 = vmax.f32 %v1392, 0.0
  %v1460 = vmax.f32 %v1394, 0.0
  %v1461 = vmax.f32 %v1396, 0.0
  %v1462 = vpack.c.bf16 %v1400, %v1398
  %v1463 = vpack.c.bf16 %v1401, %v1399
  %v1464 = vpack.c.bf16 %v1404, %v1402
  %v1465 = vpack.c.bf16 %v1405, %v1403
  %v1466 = vpack.c.bf16 %v1408, %v1406
  %v1467 = vpack.c.bf16 %v1409, %v1407
  %v1468 = vpack.c.bf16 %v1412, %v1410
  %v1469 = vpack.c.bf16 %v1413, %v1411
  %v1470 = vpack.c.bf16 %v1416, %v1414
  %v1471 = vpack.c.bf16 %v1417, %v1415
  %v1472 = vpack.c.bf16 %v1420, %v1418
  %v1473 = vpack.c.bf16 %v1421, %v1419
  %v1474 = vpack.c.bf16 %v1424, %v1422
  %v1475 = vpack.c.bf16 %v1425, %v1423
  %v1476 = vpack.c.bf16 %v1428, %v1426
  %v1477 = vpack.c.bf16 %v1429, %v1427
  %v1478 = vpack.c.bf16 %v1432, %v1430
  %v1479 = vpack.c.bf16 %v1433, %v1431
  %v1480 = vpack.c.bf16 %v1436, %v1434
  %v1481 = vpack.c.bf16 %v1437, %v1435
  %v1482 = vpack.c.bf16 %v1440, %v1438
  %v1483 = vpack.c.bf16 %v1441, %v1439
  %v1484 = vpack.c.bf16 %v1444, %v1442
  %v1485 = vpack.c.bf16 %v1445, %v1443
  %v1486 = vpack.c.bf16 %v1448, %v1446
  %v1487 = vpack.c.bf16 %v1449, %v1447
  %v1488 = vpack.c.bf16 %v1452, %v1450
  %v1489 = vpack.c.bf16 %v1453, %v1451
  %v1490 = vpack.c.bf16 %v1456, %v1454
  %v1491 = vpack.c.bf16 %v1457, %v1455
  %v1492 = vpack.c.bf16 %v1460, %v1458
  %v1493 = vpack.c.bf16 %v1461, %v1459
  %v1494 = vld [vmem:[%s5] sm:$0xf]
  %v1495 = vld [vmem:[%s5 + $0x4] sm:$0xf]
  %v1496 = vld [vmem:[%s5 + $0x8] sm:$0xf]
  %v1497 = vld [vmem:[%s5 + $0xc] sm:$0xf]
  %v1498 = vld [vmem:[%s5 + $0x10] sm:$0xf]
  %v1499 = vld [vmem:[%s5 + $0x14] sm:$0xf]
  %v1500 = vld [vmem:[%s5 + $0x18] sm:$0xf]
  %v1501 = vld [vmem:[%s5 + $0x1c] sm:$0xf]
  %v1502 = vld [vmem:[%s5 + $0x20] sm:$0xf]
  %v1503 = vld [vmem:[%s5 + $0x24] sm:$0xf]
  %v1504 = vld [vmem:[%s5 + $0x28] sm:$0xf]
  %v1505 = vld [vmem:[%s5 + $0x2c] sm:$0xf]
  %v1506 = vld [vmem:[%s5 + $0x30] sm:$0xf]
  %v1507 = vld [vmem:[%s5 + $0x34] sm:$0xf]
  %v1508 = vld [vmem:[%s5 + $0x38] sm:$0xf]
  %v1509 = vld [vmem:[%s5 + $0x3c] sm:$0xf]
  %v1510 = vld [vmem:[%s5 + $0x40] sm:$0xf]
  %v1511 = vld [vmem:[%s5 + $0x44] sm:$0xf]
  %v1512 = vld [vmem:[%s5 + $0x48] sm:$0xf]
  %v1513 = vld [vmem:[%s5 + $0x4c] sm:$0xf]
  %v1534 = vunpack.c.l.b16 %v1494
  %v1535 = vunpack.c.l.b16 %v1495
  %v1536 = vunpack.c.l.b16 %v1496
  %v1537 = vunpack.c.l.b16 %v1497
  %v1538 = vunpack.c.l.b16 %v1498
  %v1539 = vunpack.c.l.b16 %v1499
  %v1540 = vunpack.c.l.b16 %v1500
  %v1541 = vunpack.c.l.b16 %v1501
  %v1542 = vunpack.c.l.b16 %v1502
  %v1543 = vunpack.c.l.b16 %v1503
  %v1544 = vunpack.c.l.b16 %v1504
  %v1545 = vunpack.c.l.b16 %v1505
  %v1546 = vunpack.c.l.b16 %v1506
  %v1547 = vunpack.c.l.b16 %v1507
  %v1548 = vunpack.c.l.b16 %v1508
  %v1549 = vunpack.c.l.b16 %v1509
  %v1550 = vunpack.c.l.b16 %v1510
  %v1551 = vunpack.c.l.b16 %v1511
  %v1552 = vunpack.c.l.b16 %v1512
  %v1553 = vunpack.c.l.b16 %v1513
  %v1554 = vpack.c.b16 %v1535, %v1534
  %v1555 = vpack.c.b16 %v1537, %v1536
  %v1556 = vpack.c.b16 %v1539, %v1538
  %v1557 = vpack.c.b16 %v1541, %v1540
  %v1558 = vpack.c.b16 %v1543, %v1542
  %v1559 = vpack.c.b16 %v1545, %v1544
  %v1560 = vpack.c.b16 %v1547, %v1546
  %v1561 = vpack.c.b16 %v1549, %v1548
  %v1562 = vpack.c.b16 %v1551, %v1550
  %v1563 = vpack.c.b16 %v1553, %v1552
  %v1575 = vsel %vm418, %v1463, 0
  %v1578 = vsel %vm418, %v1465, 0
  %v1581 = vsel %vm418, %v1467, 0
  %v1584 = vsel %vm418, %v1469, 0
  %v1587 = vsel %vm418, %v1471, 0
  %v1590 = vsel %vm418, %v1473, 0
  %v1593 = vsel %vm418, %v1475, 0
  %v1596 = vsel %vm418, %v1477, 0
  %v1599 = vsel %vm418, %v1479, 0
  %v1602 = vsel %vm418, %v1481, 0
  %v1605 = vsel %vm418, %v1483, 0
  %v1608 = vsel %vm418, %v1485, 0
  %v1611 = vsel %vm418, %v1487, 0
  %v1614 = vsel %vm418, %v1489, 0
  %v1617 = vsel %vm418, %v1491, 0
  %v1620 = vsel %vm418, %v1493, 0
  %1622 = vmatprep.subr.bf16.mxu0 0
  %1623 = vmatpush1.bf16.msra.mxu0 %v1554
  %1624 = vmatprep.subr.bf16.mxu0 0
  %1625 = vmatpush1.bf16.msra.mxu0 %v1555
  %1626 = vmatprep.subr.bf16.mxu0 0
  %1627 = vmatpush1.bf16.msra.mxu0 %v1556
  %1628 = vmatprep.subr.bf16.mxu0 0
  %1629 = vmatpush1.bf16.msra.mxu0 %v1557
  %1630 = vmatprep.subr.bf16.mxu0 0
  %1631 = vmatpush1.bf16.msra.mxu0 %v1558
  %1632 = vmatprep.subr.bf16.mxu0 0
  %1633 = vmatpush1.bf16.msra.mxu0 %v1559
  %1634 = vmatprep.subr.bf16.mxu0 0
  %1635 = vmatpush1.bf16.msra.mxu0 %v1560
  %1636 = vmatprep.subr.bf16.mxu0 0
  %1637 = vmatpush1.bf16.msra.mxu0 %v1561
  %1638 = vmatprep.subr.bf16.mxu0 0
  %1639 = vmatpush1.bf16.msra.mxu0 %v1562
  %1640 = vmatprep.subr.bf16.mxu0 0
  %1641 = vmatpush1.bf16.msra.mxu0 %v1563
  %1642 = vmatprep.subr.bf16.mxu0 0
  %1643 = vmatpush1.bf16.msra.mxu0 0
  %1644 = vmatprep.subr.bf16.mxu0 0
  %1645 = vmatpush1.bf16.msra.mxu0 0
  %1646 = vmatprep.subr.bf16.mxu0 0
  %1647 = vmatpush1.bf16.msra.mxu0 0
  %1648 = vmatprep.subr.bf16.mxu0 0
  %1649 = vmatpush1.bf16.msra.mxu0 0
  %1650 = vmatprep.subr.bf16.mxu0 0
  %1651 = vmatpush1.bf16.msra.mxu0 0
  %1652 = vmatprep.subr.bf16.mxu0 0
  %1653 = vmatpush1.bf16.msra.mxu0 0
  %1654 = vmatprep.mubr.bf16.mxu0 %v1575
  %1655 = vmatmul.mubr.bf16.gmra.mrb[0].mxu0 %v1462
  %v1656 = vpop.f32.mrb[0].mxu0
  %v1657 = vadd.f32 0.0, %v1656
  %v1658 = vpop.f32.mrb[0].mxu0
  %v1659 = vpop.f32.mrb[0].mxu0
  %v1660 = vadd.f32 0.0, %v1659
  %v1661 = vpop.f32.mrb[0].mxu0
  %1662 = vmatprep.mubr.bf16.mxu0 %v1578
  %1663 = vmatmul.mubr.bf16.gmra.mrb[0].mxu0 %v1464
  %v1664 = vpop.f32.mrb[0].mxu0
  %v1665 = vadd.f32 0.0, %v1664
  %v1666 = vpop.f32.mrb[0].mxu0
  %v1667 = vpop.f32.mrb[0].mxu0
  %v1668 = vadd.f32 0.0, %v1667
  %v1669 = vpop.f32.mrb[0].mxu0
  %1670 = vmatprep.mubr.bf16.mxu0 %v1581
  %1671 = vmatmul.mubr.bf16.gmra.mrb[0].mxu0 %v1466
  %v1672 = vpop.f32.mrb[0].mxu0
  %v1673 = vadd.f32 0.0, %v1672
  %v1674 = vpop.f32.mrb[0].mxu0
  %v1675 = vpop.f32.mrb[0].mxu0
  %v1676 = vadd.f32 0.0, %v1675
  %v1677 = vpop.f32.mrb[0].mxu0
  %1678 = vmatprep.mubr.bf16.mxu0 %v1584
  %1679 = vmatmul.mubr.bf16.gmra.mrb[0].mxu0 %v1468
  %v1680 = vpop.f32.mrb[0].mxu0
  %v1681 = vadd.f32 0.0, %v1680
  %v1682 = vpop.f32.mrb[0].mxu0
  %v1683 = vpop.f32.mrb[0].mxu0
  %v1684 = vadd.f32 0.0, %v1683
  %v1685 = vpop.f32.mrb[0].mxu0
  %1686 = vmatprep.mubr.bf16.mxu0 %v1587
  %1687 = vmatmul.mubr.bf16.gmra.mrb[0].mxu0 %v1470
  %v1688 = vpop.f32.mrb[0].mxu0
  %v1689 = vadd.f32 0.0, %v1688
  %v1690 = vpop.f32.mrb[0].mxu0
  %v1691 = vpop.f32.mrb[0].mxu0
  %v1692 = vadd.f32 0.0, %v1691
  %v1693 = vpop.f32.mrb[0].mxu0
  %1694 = vmatprep.mubr.bf16.mxu0 %v1590
  %1695 = vmatmul.mubr.bf16.gmra.mrb[0].mxu0 %v1472
  %v1696 = vpop.f32.mrb[0].mxu0
  %v1697 = vadd.f32 0.0, %v1696
  %v1698 = vpop.f32.mrb[0].mxu0
  %v1699 = vpop.f32.mrb[0].mxu0
  %v1700 = vadd.f32 0.0, %v1699
  %v1701 = vpop.f32.mrb[0].mxu0
  %1702 = vmatprep.mubr.bf16.mxu0 %v1593
  %1703 = vmatmul.mubr.bf16.gmra.mrb[0].mxu0 %v1474
  %v1704 = vpop.f32.mrb[0].mxu0
  %v1705 = vadd.f32 0.0, %v1704
  %v1706 = vpop.f32.mrb[0].mxu0
  %v1707 = vpop.f32.mrb[0].mxu0
  %v1708 = vadd.f32 0.0, %v1707
  %v1709 = vpop.f32.mrb[0].mxu0
  %1710 = vmatprep.mubr.bf16.mxu0 %v1596
  %1711 = vmatmul.mubr.bf16.gmra.mrb[0].mxu0 %v1476
  %v1712 = vpop.f32.mrb[0].mxu0
  %v1713 = vadd.f32 0.0, %v1712
  %v1714 = vpop.f32.mrb[0].mxu0
  %v1715 = vpop.f32.mrb[0].mxu0
  %v1716 = vadd.f32 0.0, %v1715
  %v1717 = vpop.f32.mrb[0].mxu0
  %1718 = vmatprep.mubr.bf16.mxu0 %v1599
  %1719 = vmatmul.mubr.bf16.gmra.mrb[0].mxu0 %v1478
  %v1720 = vpop.f32.mrb[0].mxu0
  %v1721 = vadd.f32 0.0, %v1720
  %v1722 = vpop.f32.mrb[0].mxu0
  %v1723 = vpop.f32.mrb[0].mxu0
  %v1724 = vadd.f32 0.0, %v1723
  %v1725 = vpop.f32.mrb[0].mxu0
  %1726 = vmatprep.mubr.bf16.mxu0 %v1602
  %1727 = vmatmul.mubr.bf16.gmra.mrb[0].mxu0 %v1480
  %v1728 = vpop.f32.mrb[0].mxu0
  %v1729 = vadd.f32 0.0, %v1728
  %v1730 = vpop.f32.mrb[0].mxu0
  %v1731 = vpop.f32.mrb[0].mxu0
  %v1732 = vadd.f32 0.0, %v1731
  %v1733 = vpop.f32.mrb[0].mxu0
  %1734 = vmatprep.mubr.bf16.mxu0 %v1605
  %1735 = vmatmul.mubr.bf16.gmra.mrb[0].mxu0 %v1482
  %v1736 = vpop.f32.mrb[0].mxu0
  %v1737 = vadd.f32 0.0, %v1736
  %v1738 = vpop.f32.mrb[0].mxu0
  %v1739 = vpop.f32.mrb[0].mxu0
  %v1740 = vadd.f32 0.0, %v1739
  %v1741 = vpop.f32.mrb[0].mxu0
  %1742 = vmatprep.mubr.bf16.mxu0 %v1608
  %1743 = vmatmul.mubr.bf16.gmra.mrb[0].mxu0 %v1484
  %v1744 = vpop.f32.mrb[0].mxu0
  %v1745 = vadd.f32 0.0, %v1744
  %v1746 = vpop.f32.mrb[0].mxu0
  %v1747 = vpop.f32.mrb[0].mxu0
  %v1748 = vadd.f32 0.0, %v1747
  %v1749 = vpop.f32.mrb[0].mxu0
  %1750 = vmatprep.mubr.bf16.mxu0 %v1611
  %1751 = vmatmul.mubr.bf16.gmra.mrb[0].mxu0 %v1486
  %v1752 = vpop.f32.mrb[0].mxu0
  %v1753 = vadd.f32 0.0, %v1752
  %v1754 = vpop.f32.mrb[0].mxu0
  %v1755 = vpop.f32.mrb[0].mxu0
  %v1756 = vadd.f32 0.0, %v1755
  %v1757 = vpop.f32.mrb[0].mxu0
  %1758 = vmatprep.mubr.bf16.mxu0 %v1614
  %1759 = vmatmul.mubr.bf16.gmra.mrb[0].mxu0 %v1488
  %v1760 = vpop.f32.mrb[0].mxu0
  %v1761 = vadd.f32 0.0, %v1760
  %v1762 = vpop.f32.mrb[0].mxu0
  %v1763 = vpop.f32.mrb[0].mxu0
  %v1764 = vadd.f32 0.0, %v1763
  %v1765 = vpop.f32.mrb[0].mxu0
  %1766 = vmatprep.mubr.bf16.mxu0 %v1617
  %1767 = vmatmul.mubr.bf16.gmra.mrb[0].mxu0 %v1490
  %v1768 = vpop.f32.mrb[0].mxu0
  %v1769 = vadd.f32 0.0, %v1768
  %v1770 = vpop.f32.mrb[0].mxu0
  %v1771 = vpop.f32.mrb[0].mxu0
  %v1772 = vadd.f32 0.0, %v1771
  %v1773 = vpop.f32.mrb[0].mxu0
  %1774 = vmatprep.mubr.bf16.mxu0 %v1620
  %1775 = vmatmul.mubr.bf16.gmra.mrb[0].mxu0 %v1492
  %v1776 = vpop.f32.mrb[0].mxu0
  %v1777 = vadd.f32 0.0, %v1776
  %v1778 = vpop.f32.mrb[0].mxu0
  %v1779 = vpop.f32.mrb[0].mxu0
  %v1780 = vadd.f32 0.0, %v1779
  %v1781 = vpop.f32.mrb[0].mxu0
  %1782 = vdwg.mxu0
  %vm1783 = vcmask 523264
  %1784 = vst.msk [vmem:[%s6] sm:$0xff] %vm1783, %v1657
  %1785 = vst.msk [vmem:[%s6 + $0x8] sm:$0xff] %vm1783, %v1660
  %1786 = vst.msk [vmem:[%s6 + $0x10] sm:$0xff] %vm1783, %v1665
  %1787 = vst.msk [vmem:[%s6 + $0x18] sm:$0xff] %vm1783, %v1668
  %1788 = vst.msk [vmem:[%s6 + $0x20] sm:$0xff] %vm1783, %v1673
  %1789 = vst.msk [vmem:[%s6 + $0x28] sm:$0xff] %vm1783, %v1676
  %1790 = vst.msk [vmem:[%s6 + $0x30] sm:$0xff] %vm1783, %v1681
  %1791 = vst.msk [vmem:[%s6 + $0x38] sm:$0xff] %vm1783, %v1684
  %1792 = vst.msk [vmem:[%s6 + $0x40] sm:$0xff] %vm1783, %v1689
  %1793 = vst.msk [vmem:[%s6 + $0x48] sm:$0xff] %vm1783, %v1692
  %1794 = vst.msk [vmem:[%s6 + $0x50] sm:$0xff] %vm1783, %v1697
  %1795 = vst.msk [vmem:[%s6 + $0x58] sm:$0xff] %vm1783, %v1700
  %1796 = vst.msk [vmem:[%s6 + $0x60] sm:$0xff] %vm1783, %v1705
  %1797 = vst.msk [vmem:[%s6 + $0x68] sm:$0xff] %vm1783, %v1708
  %1798 = vst.msk [vmem:[%s6 + $0x70] sm:$0xff] %vm1783, %v1713
  %1799 = vst.msk [vmem:[%s6 + $0x78] sm:$0xff] %vm1783, %v1716
  %1800 = vst.msk [vmem:[%s6 + $0x80] sm:$0xff] %vm1783, %v1721
  %1801 = vst.msk [vmem:[%s6 + $0x88] sm:$0xff] %vm1783, %v1724
  %1802 = vst.msk [vmem:[%s6 + $0x90] sm:$0xff] %vm1783, %v1729
  %1803 = vst.msk [vmem:[%s6 + $0x98] sm:$0xff] %vm1783, %v1732
  %1804 = vst.msk [vmem:[%s6 + $0xa0] sm:$0xff] %vm1783, %v1737
  %1805 = vst.msk [vmem:[%s6 + $0xa8] sm:$0xff] %vm1783, %v1740
  %1806 = vst.msk [vmem:[%s6 + $0xb0] sm:$0xff] %vm1783, %v1745
  %1807 = vst.msk [vmem:[%s6 + $0xb8] sm:$0xff] %vm1783, %v1748
  %1808 = vst.msk [vmem:[%s6 + $0xc0] sm:$0xff] %vm1783, %v1753
  %1809 = vst.msk [vmem:[%s6 + $0xc8] sm:$0xff] %vm1783, %v1756
  %1810 = vst.msk [vmem:[%s6 + $0xd0] sm:$0xff] %vm1783, %v1761
  %1811 = vst.msk [vmem:[%s6 + $0xd8] sm:$0xff] %vm1783, %v1764
  %1812 = vst.msk [vmem:[%s6 + $0xe0] sm:$0xff] %vm1783, %v1769
  %1813 = vst.msk [vmem:[%s6 + $0xe8] sm:$0xff] %vm1783, %v1772
  %1814 = vst.msk [vmem:[%s6 + $0xf0] sm:$0xff] %vm1783, %v1777
  %1815 = vst.msk [vmem:[%s6 + $0xf8] sm:$0xff] %vm1783, %v1780
  // Predicated region
  $region26: #{forward.1} parent=0 // pred_check
    _
  $region27: #{forward.1} parent=0 // pred_check_branch
    %1817 = sbr.rel (0) target = $region29
  $region28: #{forward.1} parent=0 // pred_region
    _
  $region29: #{forward.1} parent=0 // pred_fallthru
    _
  // Predicated region
  $region30: #{forward.1} parent=0 // pred_check
    _
  $region31: #{forward.1} parent=0 // pred_check_branch
    %1819 = sbr.rel (0) target = $region33
  $region32: #{forward.1} parent=0 // pred_region
    _
  $region33: #{forward.1} parent=0 // pred_fallthru
    _

</llo_original>
